<compile_context>
chip_gen: v5e
topology: v5e:2x2
jax: 0.10.0
libtpu: 0.0.40
codegen_flags: <defaults>
</compile_context>

<pallas_src>
import math

import jax
import jax.numpy as jnp
from jax.experimental import pallas as pl
from jax.experimental.pallas import tpu as pltpu

# ----------------------------- model config ---------------------------------
INPUT_SIZE = 4      # args.input_size
HIDDEN = 32         # args.hidden_size (d_model)
N_HEADS = 4         # args.n_heads
HEAD_DIM = HIDDEN // N_HEADS
D_FF = 64           # args.d_ff
NUM_LAYERS = 2      # args.num_layers
OUTPUT_SIZE = 3     # args.output_size
TIME_WINDOW = 8     # args.time_window  (x_enc sequence length)
DEC_LEN = 4         # x_dec sequence length
BATCH = 2
SEQ = TIME_WINDOW + DEC_LEN
BS = BATCH * SEQ
LN_EPS = 1e-5       # torch.nn.LayerNorm default
LANES = 128
NEG_INF = -1e30


# --------------------------- packed-slab layouts ------------------------------
def _align(n, a):
    return ((n + a - 1) // a) * a


# bf16 weight slab: rows aligned to 16 (bf16 sublane tile), 128 lanes wide.
_W_ENTRIES = [("w_in", INPUT_SIZE, HIDDEN)]
for _l in range(NUM_LAYERS):
    _W_ENTRIES += [(f"wqkv{_l}", HIDDEN, 3 * HIDDEN),
                   (f"wo{_l}", HIDDEN, HIDDEN),
                   (f"w1{_l}", HIDDEN, D_FF),
                   (f"w2{_l}", D_FF, HIDDEN)]
_W_ENTRIES.append(("w_out", HIDDEN, OUTPUT_SIZE))

W_LAYOUT = {}
_off = 0
for _name, _r, _c in _W_ENTRIES:
    W_LAYOUT[_name] = (_off, _r, _c)
    _off = _align(_off + _r, 16)
W_ROWS = _align(_off, 16)

# f32 vector slab: rows aligned to 8 (f32 sublane tile), 128 lanes wide.
_V_ENTRIES = [("posb", BS, HIDDEN)]       # tiled (pe + input-proj bias)
for _l in range(NUM_LAYERS):
    _V_ENTRIES += [(f"bqkv{_l}", 1, 3 * HIDDEN), (f"bo{_l}", 1, HIDDEN),
                   (f"g1{_l}", 1, HIDDEN), (f"be1{_l}", 1, HIDDEN),
                   (f"b1{_l}", 1, D_FF), (f"b2{_l}", 1, HIDDEN),
                   (f"g2{_l}", 1, HIDDEN), (f"be2{_l}", 1, HIDDEN)]
_V_ENTRIES.append(("b_out", 1, OUTPUT_SIZE))

V_LAYOUT = {}
_off = 0
for _name, _r, _c in _V_ENTRIES:
    V_LAYOUT[_name] = (_off, _r, _c)
    _off = _align(_off + _r, 8)
V_ROWS = _align(_off, 8)


# ------------------------------ kernel helpers -------------------------------
def _wslice(w_ref, name):
    off, r, c = W_LAYOUT[name]
    return w_ref[off:off + r, 0:c]          # static, tile-aligned slice (bf16)


def _vslice(v_ref, name):
    off, r, c = V_LAYOUT[name]
    return v_ref[off:off + r, 0:c]          # static, tile-aligned slice (f32)


def _layer_norm(x, gamma, beta):
    mean = jnp.mean(x, axis=-1, keepdims=True)
    var = jnp.mean((x - mean) ** 2, axis=-1, keepdims=True)
    return (x - mean) * jax.lax.rsqrt(var + LN_EPS) * gamma + beta


def _encoder_layer(h, w_ref, v_ref, l, same_batch):
    wqkv = _wslice(w_ref, f"wqkv{l}")       # (H, 3H) bf16, Q cols pre-scaled
    wo = _wslice(w_ref, f"wo{l}")           # (H, H)  bf16
    w1 = _wslice(w_ref, f"w1{l}")           # (H, Dff) bf16
    w2 = _wslice(w_ref, f"w2{l}")           # (Dff, H) bf16
    bqkv = _vslice(v_ref, f"bqkv{l}")       # (1, 3H) f32, Q part pre-scaled
    bo = _vslice(v_ref, f"bo{l}")
    g1 = _vslice(v_ref, f"g1{l}")
    be1 = _vslice(v_ref, f"be1{l}")
    b1 = _vslice(v_ref, f"b1{l}")
    b2 = _vslice(v_ref, f"b2{l}")
    g2 = _vslice(v_ref, f"g2{l}")
    be2 = _vslice(v_ref, f"be2{l}")

    # --- multi-head self attention (post-norm, norm_first=False) ---
    qkv = jnp.dot(h.astype(jnp.bfloat16), wqkv,
                  preferred_element_type=jnp.float32) + bqkv        # (BS, 3H)

    heads = []
    for i in range(N_HEADS):
        q_lo = i * HEAD_DIM
        qh = qkv[:, q_lo:q_lo + HEAD_DIM].astype(jnp.bfloat16)      # (BS, hd)
        kh_t = qkv[:, HIDDEN + q_lo:HIDDEN + q_lo + HEAD_DIM].T     # (hd, BS)
        vh = qkv[:, 2 * HIDDEN + q_lo:2 * HIDDEN + q_lo + HEAD_DIM]
        s = jnp.dot(qh, kh_t.astype(jnp.bfloat16),
                    preferred_element_type=jnp.float32)             # (BS, BS)
        # keep the two batch elements independent (scale already baked in)
        s = jnp.where(same_batch, s, NEG_INF)
        s = s - jnp.max(s, axis=-1, keepdims=True)
        p = jnp.exp(s)
        p = p / jnp.sum(p, axis=-1, keepdims=True)                  # exact
        heads.append(jnp.dot(p.astype(jnp.bfloat16),
                             vh.astype(jnp.bfloat16),
                             preferred_element_type=jnp.float32))   # (BS, hd)
    attn = jnp.concatenate(heads, axis=-1)                          # (BS, H)
    attn = jnp.dot(attn.astype(jnp.bfloat16), wo,
                   preferred_element_type=jnp.float32) + bo
    h = _layer_norm(h + attn, g1, be1)      # dropout = identity (inference)

    # --- feed forward (ReLU, the TransformerEncoderLayer default) ---
    ff = jnp.dot(h.astype(jnp.bfloat16), w1,
                 preferred_element_type=jnp.float32) + b1
    ff = jnp.maximum(ff, 0.0)
    ff = jnp.dot(ff.astype(jnp.bfloat16), w2,
                 preferred_element_type=jnp.float32) + b2
    return _layer_norm(h + ff, g2, be2)


# ------------------------------ fused kernel ---------------------------------
def _fused_forward_kernel(x_ref, w_ref, v_ref, o_ref):
    # input projection + positional encoding (+ input bias, pre-folded)
    x = x_ref[...].astype(jnp.bfloat16)                             # (BS, In)
    w_in = _wslice(w_ref, "w_in")                                   # (In, H)
    posb = _vslice(v_ref, "posb")                                   # (BS, H)
    h = jnp.dot(x, w_in, preferred_element_type=jnp.float32) + posb

    # block-diagonal "same batch element" mask (valid for BATCH == 2)
    ri = jax.lax.broadcasted_iota(jnp.int32, (BS, BS), 0)
    ci = jax.lax.broadcasted_iota(jnp.int32, (BS, BS), 1)
    same_batch = (ri < SEQ) == (ci < SEQ)

    for l in range(NUM_LAYERS):
        h = _encoder_layer(h, w_ref, v_ref, l, same_batch)

    # last hidden state of each sequence -> output projection, ONE store
    last = jnp.concatenate(
        [h[(b + 1) * SEQ - 1:(b + 1) * SEQ, :] for b in range(BATCH)], axis=0)
    w_out = _wslice(w_ref, "w_out")                                 # (H, O)
    b_out = _vslice(v_ref, "b_out")                                 # (1, O)
    o_ref[...] = jnp.dot(last.astype(jnp.bfloat16), w_out,
                         preferred_element_type=jnp.float32) + b_out
    # TODO(synk): dropout layers omitted (inference mode => identity)


# ------------------------------ wrapper --------------------------------------
def model_forward(w_slab, v_slab, x_enc, x_dec):
    # concat + batch-flatten in the wrapper (pure layout plumbing)
    x = jnp.concatenate([x_enc, x_dec], axis=1).astype(jnp.float32)
    x = x.reshape(BS, INPUT_SIZE)
    vmem = pltpu.MemorySpace.VMEM
    return pl.pallas_call(
        _fused_forward_kernel,
        out_shape=jax.ShapeDtypeStruct((BATCH, OUTPUT_SIZE), jnp.float32),
        in_specs=[pl.BlockSpec(memory_space=vmem),
                  pl.BlockSpec(memory_space=vmem),
                  pl.BlockSpec(memory_space=vmem)],
        out_specs=pl.BlockSpec(memory_space=vmem),
    )(x, w_slab, v_slab)


# ------------------------- parameters & packing -------------------------------
def make_positional_encoding(max_len, d_model):
    position = jnp.arange(max_len, dtype=jnp.float32)[:, None]
    div_term = jnp.exp(jnp.arange(0, d_model, 2, dtype=jnp.float32)
                       * (-math.log(10000.0) / d_model))
    pe = jnp.zeros((max_len, d_model), jnp.float32)
    pe = pe.at[:, 0::2].set(jnp.sin(position * div_term))
    pe = pe.at[:, 1::2].set(jnp.cos(position * div_term))
    return pe  # (max_len, d_model)


def init_params(key):
    ks = iter(jax.random.split(key, 8 + 8 * NUM_LAYERS))

    def dense(k, fan_in, fan_out):
        lim = 1.0 / math.sqrt(fan_in)
        return jax.random.uniform(k, (fan_in, fan_out), jnp.float32, -lim, lim)

    params = {
        "pe": make_positional_encoding(SEQ, HIDDEN),
        "w_in": dense(next(ks), INPUT_SIZE, HIDDEN),
        "b_in": jnp.zeros((1, HIDDEN), jnp.float32),
        "w_out": dense(next(ks), HIDDEN, OUTPUT_SIZE),
        "b_out": jnp.zeros((1, OUTPUT_SIZE), jnp.float32),
        "layers": [],
    }
    for _ in range(NUM_LAYERS):
        params["layers"].append({
            "wqkv": dense(next(ks), HIDDEN, 3 * HIDDEN),
            "bqkv": jnp.zeros((1, 3 * HIDDEN), jnp.float32),
            "wo": dense(next(ks), HIDDEN, HIDDEN),
            "bo": jnp.zeros((1, HIDDEN), jnp.float32),
            "g1": jnp.ones((1, HIDDEN), jnp.float32),
            "be1": jnp.zeros((1, HIDDEN), jnp.float32),
            "w1": dense(next(ks), HIDDEN, D_FF),
            "b1": jnp.zeros((1, D_FF), jnp.float32),
            "w2": dense(next(ks), D_FF, HIDDEN),
            "b2": jnp.zeros((1, HIDDEN), jnp.float32),
            "g2": jnp.ones((1, HIDDEN), jnp.float32),
            "be2": jnp.zeros((1, HIDDEN), jnp.float32),
        })
    return params


def pack_params(params):
    """Pack every parameter into two lane-dense VMEM slabs (done once)."""
    scale = 1.0 / math.sqrt(HEAD_DIM)
    w_slab = jnp.zeros((W_ROWS, LANES), jnp.bfloat16)
    v_slab = jnp.zeros((V_ROWS, LANES), jnp.float32)

    def put_w(slab, name, arr):
        off, r, c = W_LAYOUT[name]
        return slab.at[off:off + r, 0:c].set(arr.astype(jnp.bfloat16))

    def put_v(slab, name, arr):
        off, r, c = V_LAYOUT[name]
        return slab.at[off:off + r, 0:c].set(
            arr.astype(jnp.float32).reshape(r, c))

    w_slab = put_w(w_slab, "w_in", params["w_in"])
    w_slab = put_w(w_slab, "w_out", params["w_out"])
    # fold input-projection bias into the (batch-tiled) positional encoding
    posb = jnp.tile(params["pe"] + params["b_in"], (BATCH, 1))   # (BS, H)
    v_slab = put_v(v_slab, "posb", posb)
    v_slab = put_v(v_slab, "b_out", params["b_out"])

    for l, lp in enumerate(params["layers"]):
        # bake the 1/sqrt(head_dim) attention scale into the Q block
        wqkv = lp["wqkv"].at[:, 0:HIDDEN].multiply(scale)
        bqkv = lp["bqkv"].at[:, 0:HIDDEN].multiply(scale)
        w_slab = put_w(w_slab, f"wqkv{l}", wqkv)
        w_slab = put_w(w_slab, f"wo{l}", lp["wo"])
        w_slab = put_w(w_slab, f"w1{l}", lp["w1"])
        w_slab = put_w(w_slab, f"w2{l}", lp["w2"])
        v_slab = put_v(v_slab, f"bqkv{l}", bqkv)
        v_slab = put_v(v_slab, f"bo{l}", lp["bo"])
        v_slab = put_v(v_slab, f"g1{l}", lp["g1"])
        v_slab = put_v(v_slab, f"be1{l}", lp["be1"])
        v_slab = put_v(v_slab, f"b1{l}", lp["b1"])
        v_slab = put_v(v_slab, f"b2{l}", lp["b2"])
        v_slab = put_v(v_slab, f"g2{l}", lp["g2"])
        v_slab = put_v(v_slab, f"be2{l}", lp["be2"])
    return w_slab, v_slab


# --------------------------------- main ---------------------------------------
if __name__ == "__main__":
    key = jax.random.PRNGKey(0)
    k_enc, k_dec, k_params = jax.random.split(key, 3)

    x_enc = jax.random.normal(k_enc, (BATCH, TIME_WINDOW, INPUT_SIZE), jnp.float32)
    x_dec = jax.random.normal(k_dec, (BATCH, DEC_LEN, INPUT_SIZE), jnp.float32)

    params = init_params(k_params)
    w_slab, v_slab = pack_params(params)

    preds = model_forward(w_slab, v_slab, x_enc, x_dec)
    preds = jax.block_until_ready(preds)
    assert preds.shape == (BATCH, OUTPUT_SIZE), preds.shape
    assert bool(jnp.all(jnp.isfinite(preds)))
    print("KERNEL_OK")
</pallas_src>

<mosaic_0001>
module attributes {stable_mosaic.version = 11 : i64} {
  func.func @_fused_forward_kernel(%arg0: memref<24x4xf32, #tpu.memory_space<vmem>>, %arg1: memref<368x128xbf16, #tpu.memory_space<vmem>>, %arg2: memref<160x128xf32, #tpu.memory_space<vmem>>, %arg3: memref<2x3xf32, #tpu.memory_space<vmem>>) attributes {dimension_semantics = [], scalar_prefetch = 0 : i64, scratch_operands = 0 : i64, tpu.core_type = #tpu.core_type<tc>} {
    %c0 = arith.constant 0 : index
    %c0_0 = arith.constant 0 : index
    %0 = vector.load %arg0[%c0, %c0_0] : memref<24x4xf32, #tpu.memory_space<vmem>>, vector<24x4xf32>
    %1 = arith.truncf %0 : vector<24x4xf32> to vector<24x4xbf16>
    %c0_1 = arith.constant 0 : index
    %c0_2 = arith.constant 0 : index
    %2 = vector.load %arg1[%c0_1, %c0_2] : memref<368x128xbf16, #tpu.memory_space<vmem>>, vector<4x32xbf16>
    %c0_3 = arith.constant 0 : index
    %c0_4 = arith.constant 0 : index
    %3 = vector.load %arg2[%c0_3, %c0_4] : memref<160x128xf32, #tpu.memory_space<vmem>>, vector<24x32xf32>
    %cst = arith.constant dense<0.000000e+00> : vector<24x32xf32>
    %4 = tpu.matmul %1, %2, %cst {dimension_numbers = #tpu.dot_dimension_numbers<[1], [0], [0], [1], [0, 0, 1, 1], [], []>} : vector<24x4xbf16>, vector<4x32xbf16>, vector<24x32xf32> -> vector<24x32xf32>
    %5 = arith.addf %4, %3 : vector<24x32xf32>
    %6 = tpu.iota {dimensions = array<i32: 0>} : vector<24x24xi32>
    %7 = tpu.iota {dimensions = array<i32: 1>} : vector<24x24xi32>
    %c12_i32 = arith.constant 12 : i32
    %8 = vector.broadcast %c12_i32 : i32 to vector<24x24xi32>
    %9 = arith.cmpi slt, %6, %8 : vector<24x24xi32>
    %c12_i32_5 = arith.constant 12 : i32
    %10 = vector.broadcast %c12_i32_5 : i32 to vector<24x24xi32>
    %11 = arith.cmpi slt, %7, %10 : vector<24x24xi32>
    %12 = arith.xori %9, %11 : vector<24x24xi1>
    %cst_6 = arith.constant dense<true> : vector<24x24xi1>
    %13 = arith.xori %12, %cst_6 : vector<24x24xi1>
    %c16 = arith.constant 16 : index
    %c0_7 = arith.constant 0 : index
    %14 = vector.load %arg1[%c16, %c0_7] : memref<368x128xbf16, #tpu.memory_space<vmem>>, vector<32x96xbf16>
    %c48 = arith.constant 48 : index
    %c0_8 = arith.constant 0 : index
    %15 = vector.load %arg1[%c48, %c0_8] : memref<368x128xbf16, #tpu.memory_space<vmem>>, vector<32x32xbf16>
    %c80 = arith.constant 80 : index
    %c0_9 = arith.constant 0 : index
    %16 = vector.load %arg1[%c80, %c0_9] : memref<368x128xbf16, #tpu.memory_space<vmem>>, vector<32x64xbf16>
    %c112 = arith.constant 112 : index
    %c0_10 = arith.constant 0 : index
    %17 = vector.load %arg1[%c112, %c0_10] : memref<368x128xbf16, #tpu.memory_space<vmem>>, vector<64x32xbf16>
    %c24 = arith.constant 24 : index
    %c0_11 = arith.constant 0 : index
    %18 = vector.load %arg2[%c24, %c0_11] : memref<160x128xf32, #tpu.memory_space<vmem>>, vector<1x96xf32>
    %c32 = arith.constant 32 : index
    %c0_12 = arith.constant 0 : index
    %19 = vector.load %arg2[%c32, %c0_12] : memref<160x128xf32, #tpu.memory_space<vmem>>, vector<1x32xf32>
    %c40 = arith.constant 40 : index
    %c0_13 = arith.constant 0 : index
    %20 = vector.load %arg2[%c40, %c0_13] : memref<160x128xf32, #tpu.memory_space<vmem>>, vector<1x32xf32>
    %c48_14 = arith.constant 48 : index
    %c0_15 = arith.constant 0 : index
    %21 = vector.load %arg2[%c48_14, %c0_15] : memref<160x128xf32, #tpu.memory_space<vmem>>, vector<1x32xf32>
    %c56 = arith.constant 56 : index
    %c0_16 = arith.constant 0 : index
    %22 = vector.load %arg2[%c56, %c0_16] : memref<160x128xf32, #tpu.memory_space<vmem>>, vector<1x64xf32>
    %c64 = arith.constant 64 : index
    %c0_17 = arith.constant 0 : index
    %23 = vector.load %arg2[%c64, %c0_17] : memref<160x128xf32, #tpu.memory_space<vmem>>, vector<1x32xf32>
    %c72 = arith.constant 72 : index
    %c0_18 = arith.constant 0 : index
    %24 = vector.load %arg2[%c72, %c0_18] : memref<160x128xf32, #tpu.memory_space<vmem>>, vector<1x32xf32>
    %c80_19 = arith.constant 80 : index
    %c0_20 = arith.constant 0 : index
    %25 = vector.load %arg2[%c80_19, %c0_20] : memref<160x128xf32, #tpu.memory_space<vmem>>, vector<1x32xf32>
    %26 = arith.truncf %5 : vector<24x32xf32> to vector<24x32xbf16>
    %cst_21 = arith.constant dense<0.000000e+00> : vector<24x96xf32>
    %27 = tpu.matmul %26, %14, %cst_21 {dimension_numbers = #tpu.dot_dimension_numbers<[1], [0], [0], [1], [0, 0, 1, 1], [], []>} : vector<24x32xbf16>, vector<32x96xbf16>, vector<24x96xf32> -> vector<24x96xf32>
    %28 = vector.broadcast %18 : vector<1x96xf32> to vector<24x96xf32>
    %29 = arith.addf %27, %28 : vector<24x96xf32>
    %30 = vector.extract_strided_slice %29 {offsets = [0, 0], sizes = [24, 8], strides = [1, 1]} : vector<24x96xf32> to vector<24x8xf32>
    %31 = arith.truncf %30 : vector<24x8xf32> to vector<24x8xbf16>
    %32 = vector.extract_strided_slice %29 {offsets = [0, 32], sizes = [24, 8], strides = [1, 1]} : vector<24x96xf32> to vector<24x8xf32>
    %33 = tpu.transpose %32, [1, 0] : vector<24x8xf32> -> vector<8x24xf32>
    %34 = vector.extract_strided_slice %29 {offsets = [0, 64], sizes = [24, 8], strides = [1, 1]} : vector<24x96xf32> to vector<24x8xf32>
    %35 = arith.truncf %33 : vector<8x24xf32> to vector<8x24xbf16>
    %cst_22 = arith.constant dense<0.000000e+00> : vector<24x24xf32>
    %36 = tpu.matmul %31, %35, %cst_22 {dimension_numbers = #tpu.dot_dimension_numbers<[1], [0], [0], [1], [0, 0, 1, 1], [], []>} : vector<24x8xbf16>, vector<8x24xbf16>, vector<24x24xf32> -> vector<24x24xf32>
    %cst_23 = arith.constant -1.000000e+30 : f32
    %37 = vector.broadcast %cst_23 : f32 to vector<24x24xf32>
    %38 = arith.select %13, %36, %37 : vector<24x24xi1>, vector<24x24xf32>
    %cst_24 = arith.constant dense<0xFF800000> : vector<24xf32>
    %39 = vector.multi_reduction <maximumf>, %38, %cst_24 [1] : vector<24x24xf32> to vector<24xf32>
    %40 = vector.shape_cast %39 : vector<24xf32> to vector<24x1xf32>
    %41 = vector.broadcast %40 : vector<24x1xf32> to vector<24x24xf32>
    %42 = arith.subf %38, %41 : vector<24x24xf32>
    %43 = math.exp %42 : vector<24x24xf32>
    %cst_25 = arith.constant dense<0.000000e+00> : vector<24xf32>
    %44 = vector.multi_reduction <add>, %43, %cst_25 [1] : vector<24x24xf32> to vector<24xf32>
    %45 = vector.shape_cast %44 : vector<24xf32> to vector<24x1xf32>
    %46 = vector.broadcast %45 : vector<24x1xf32> to vector<24x24xf32>
    %47 = arith.divf %43, %46 : vector<24x24xf32>
    %48 = arith.truncf %47 : vector<24x24xf32> to vector<24x24xbf16>
    %49 = arith.truncf %34 : vector<24x8xf32> to vector<24x8xbf16>
    %cst_26 = arith.constant dense<0.000000e+00> : vector<24x8xf32>
    %50 = tpu.matmul %48, %49, %cst_26 {dimension_numbers = #tpu.dot_dimension_numbers<[1], [0], [0], [1], [0, 0, 1, 1], [], []>} : vector<24x24xbf16>, vector<24x8xbf16>, vector<24x8xf32> -> vector<24x8xf32>
    %51 = vector.extract_strided_slice %29 {offsets = [0, 8], sizes = [24, 8], strides = [1, 1]} : vector<24x96xf32> to vector<24x8xf32>
    %52 = arith.truncf %51 : vector<24x8xf32> to vector<24x8xbf16>
    %53 = vector.extract_strided_slice %29 {offsets = [0, 40], sizes = [24, 8], strides = [1, 1]} : vector<24x96xf32> to vector<24x8xf32>
    %54 = tpu.transpose %53, [1, 0] : vector<24x8xf32> -> vector<8x24xf32>
    %55 = vector.extract_strided_slice %29 {offsets = [0, 72], sizes = [24, 8], strides = [1, 1]} : vector<24x96xf32> to vector<24x8xf32>
    %56 = arith.truncf %54 : vector<8x24xf32> to vector<8x24xbf16>
    %cst_27 = arith.constant dense<0.000000e+00> : vector<24x24xf32>
    %57 = tpu.matmul %52, %56, %cst_27 {dimension_numbers = #tpu.dot_dimension_numbers<[1], [0], [0], [1], [0, 0, 1, 1], [], []>} : vector<24x8xbf16>, vector<8x24xbf16>, vector<24x24xf32> -> vector<24x24xf32>
    %cst_28 = arith.constant -1.000000e+30 : f32
    %58 = vector.broadcast %cst_28 : f32 to vector<24x24xf32>
    %59 = arith.select %13, %57, %58 : vector<24x24xi1>, vector<24x24xf32>
    %cst_29 = arith.constant dense<0xFF800000> : vector<24xf32>
    %60 = vector.multi_reduction <maximumf>, %59, %cst_29 [1] : vector<24x24xf32> to vector<24xf32>
    %61 = vector.shape_cast %60 : vector<24xf32> to vector<24x1xf32>
    %62 = vector.broadcast %61 : vector<24x1xf32> to vector<24x24xf32>
    %63 = arith.subf %59, %62 : vector<24x24xf32>
    %64 = math.exp %63 : vector<24x24xf32>
    %cst_30 = arith.constant dense<0.000000e+00> : vector<24xf32>
    %65 = vector.multi_reduction <add>, %64, %cst_30 [1] : vector<24x24xf32> to vector<24xf32>
    %66 = vector.shape_cast %65 : vector<24xf32> to vector<24x1xf32>
    %67 = vector.broadcast %66 : vector<24x1xf32> to vector<24x24xf32>
    %68 = arith.divf %64, %67 : vector<24x24xf32>
    %69 = arith.truncf %68 : vector<24x24xf32> to vector<24x24xbf16>
    %70 = arith.truncf %55 : vector<24x8xf32> to vector<24x8xbf16>
    %cst_31 = arith.constant dense<0.000000e+00> : vector<24x8xf32>
    %71 = tpu.matmul %69, %70, %cst_31 {dimension_numbers = #tpu.dot_dimension_numbers<[1], [0], [0], [1], [0, 0, 1, 1], [], []>} : vector<24x24xbf16>, vector<24x8xbf16>, vector<24x8xf32> -> vector<24x8xf32>
    %72 = vector.extract_strided_slice %29 {offsets = [0, 16], sizes = [24, 8], strides = [1, 1]} : vector<24x96xf32> to vector<24x8xf32>
    %73 = arith.truncf %72 : vector<24x8xf32> to vector<24x8xbf16>
    %74 = vector.extract_strided_slice %29 {offsets = [0, 48], sizes = [24, 8], strides = [1, 1]} : vector<24x96xf32> to vector<24x8xf32>
    %75 = tpu.transpose %74, [1, 0] : vector<24x8xf32> -> vector<8x24xf32>
    %76 = vector.extract_strided_slice %29 {offsets = [0, 80], sizes = [24, 8], strides = [1, 1]} : vector<24x96xf32> to vector<24x8xf32>
    %77 = arith.truncf %75 : vector<8x24xf32> to vector<8x24xbf16>
    %cst_32 = arith.constant dense<0.000000e+00> : vector<24x24xf32>
    %78 = tpu.matmul %73, %77, %cst_32 {dimension_numbers = #tpu.dot_dimension_numbers<[1], [0], [0], [1], [0, 0, 1, 1], [], []>} : vector<24x8xbf16>, vector<8x24xbf16>, vector<24x24xf32> -> vector<24x24xf32>
    %cst_33 = arith.constant -1.000000e+30 : f32
    %79 = vector.broadcast %cst_33 : f32 to vector<24x24xf32>
    %80 = arith.select %13, %78, %79 : vector<24x24xi1>, vector<24x24xf32>
    %cst_34 = arith.constant dense<0xFF800000> : vector<24xf32>
    %81 = vector.multi_reduction <maximumf>, %80, %cst_34 [1] : vector<24x24xf32> to vector<24xf32>
    %82 = vector.shape_cast %81 : vector<24xf32> to vector<24x1xf32>
    %83 = vector.broadcast %82 : vector<24x1xf32> to vector<24x24xf32>
    %84 = arith.subf %80, %83 : vector<24x24xf32>
    %85 = math.exp %84 : vector<24x24xf32>
    %cst_35 = arith.constant dense<0.000000e+00> : vector<24xf32>
    %86 = vector.multi_reduction <add>, %85, %cst_35 [1] : vector<24x24xf32> to vector<24xf32>
    %87 = vector.shape_cast %86 : vector<24xf32> to vector<24x1xf32>
    %88 = vector.broadcast %87 : vector<24x1xf32> to vector<24x24xf32>
    %89 = arith.divf %85, %88 : vector<24x24xf32>
    %90 = arith.truncf %89 : vector<24x24xf32> to vector<24x24xbf16>
    %91 = arith.truncf %76 : vector<24x8xf32> to vector<24x8xbf16>
    %cst_36 = arith.constant dense<0.000000e+00> : vector<24x8xf32>
    %92 = tpu.matmul %90, %91, %cst_36 {dimension_numbers = #tpu.dot_dimension_numbers<[1], [0], [0], [1], [0, 0, 1, 1], [], []>} : vector<24x24xbf16>, vector<24x8xbf16>, vector<24x8xf32> -> vector<24x8xf32>
    %93 = vector.extract_strided_slice %29 {offsets = [0, 24], sizes = [24, 8], strides = [1, 1]} : vector<24x96xf32> to vector<24x8xf32>
    %94 = arith.truncf %93 : vector<24x8xf32> to vector<24x8xbf16>
    %95 = vector.extract_strided_slice %29 {offsets = [0, 56], sizes = [24, 8], strides = [1, 1]} : vector<24x96xf32> to vector<24x8xf32>
    %96 = tpu.transpose %95, [1, 0] : vector<24x8xf32> -> vector<8x24xf32>
    %97 = vector.extract_strided_slice %29 {offsets = [0, 88], sizes = [24, 8], strides = [1, 1]} : vector<24x96xf32> to vector<24x8xf32>
    %98 = arith.truncf %96 : vector<8x24xf32> to vector<8x24xbf16>
    %cst_37 = arith.constant dense<0.000000e+00> : vector<24x24xf32>
    %99 = tpu.matmul %94, %98, %cst_37 {dimension_numbers = #tpu.dot_dimension_numbers<[1], [0], [0], [1], [0, 0, 1, 1], [], []>} : vector<24x8xbf16>, vector<8x24xbf16>, vector<24x24xf32> -> vector<24x24xf32>
    %cst_38 = arith.constant -1.000000e+30 : f32
    %100 = vector.broadcast %cst_38 : f32 to vector<24x24xf32>
    %101 = arith.select %13, %99, %100 : vector<24x24xi1>, vector<24x24xf32>
    %cst_39 = arith.constant dense<0xFF800000> : vector<24xf32>
    %102 = vector.multi_reduction <maximumf>, %101, %cst_39 [1] : vector<24x24xf32> to vector<24xf32>
    %103 = vector.shape_cast %102 : vector<24xf32> to vector<24x1xf32>
    %104 = vector.broadcast %103 : vector<24x1xf32> to vector<24x24xf32>
    %105 = arith.subf %101, %104 : vector<24x24xf32>
    %106 = math.exp %105 : vector<24x24xf32>
    %cst_40 = arith.constant dense<0.000000e+00> : vector<24xf32>
    %107 = vector.multi_reduction <add>, %106, %cst_40 [1] : vector<24x24xf32> to vector<24xf32>
    %108 = vector.shape_cast %107 : vector<24xf32> to vector<24x1xf32>
    %109 = vector.broadcast %108 : vector<24x1xf32> to vector<24x24xf32>
    %110 = arith.divf %106, %109 : vector<24x24xf32>
    %111 = arith.truncf %110 : vector<24x24xf32> to vector<24x24xbf16>
    %112 = arith.truncf %97 : vector<24x8xf32> to vector<24x8xbf16>
    %cst_41 = arith.constant dense<0.000000e+00> : vector<24x8xf32>
    %113 = tpu.matmul %111, %112, %cst_41 {dimension_numbers = #tpu.dot_dimension_numbers<[1], [0], [0], [1], [0, 0, 1, 1], [], []>} : vector<24x24xbf16>, vector<24x8xbf16>, vector<24x8xf32> -> vector<24x8xf32>
    %114 = tpu.concatenate %50, %71, %92, %113 in 1 : vector<24x8xf32>, vector<24x8xf32>, vector<24x8xf32>, vector<24x8xf32> -> vector<24x32xf32>
    %115 = arith.truncf %114 : vector<24x32xf32> to vector<24x32xbf16>
    %cst_42 = arith.constant dense<0.000000e+00> : vector<24x32xf32>
    %116 = tpu.matmul %115, %15, %cst_42 {dimension_numbers = #tpu.dot_dimension_numbers<[1], [0], [0], [1], [0, 0, 1, 1], [], []>} : vector<24x32xbf16>, vector<32x32xbf16>, vector<24x32xf32> -> vector<24x32xf32>
    %117 = vector.broadcast %19 : vector<1x32xf32> to vector<24x32xf32>
    %118 = arith.addf %116, %117 : vector<24x32xf32>
    %119 = arith.addf %5, %118 : vector<24x32xf32>
    %cst_43 = arith.constant dense<0.000000e+00> : vector<24xf32>
    %120 = vector.multi_reduction <add>, %119, %cst_43 [1] : vector<24x32xf32> to vector<24xf32>
    %121 = vector.shape_cast %120 : vector<24xf32> to vector<24x1xf32>
    %cst_44 = arith.constant 3.200000e+01 : f32
    %122 = vector.broadcast %cst_44 : f32 to vector<24x1xf32>
    %123 = arith.divf %121, %122 : vector<24x1xf32>
    %124 = vector.broadcast %123 : vector<24x1xf32> to vector<24x32xf32>
    %125 = arith.subf %119, %124 : vector<24x32xf32>
    %126 = arith.mulf %125, %125 : vector<24x32xf32>
    %cst_45 = arith.constant dense<0.000000e+00> : vector<24xf32>
    %127 = vector.multi_reduction <add>, %126, %cst_45 [1] : vector<24x32xf32> to vector<24xf32>
    %128 = vector.shape_cast %127 : vector<24xf32> to vector<24x1xf32>
    %cst_46 = arith.constant 3.200000e+01 : f32
    %129 = vector.broadcast %cst_46 : f32 to vector<24x1xf32>
    %130 = arith.divf %128, %129 : vector<24x1xf32>
    %131 = vector.broadcast %123 : vector<24x1xf32> to vector<24x32xf32>
    %132 = arith.subf %119, %131 : vector<24x32xf32>
    %cst_47 = arith.constant 9.99999974E-6 : f32
    %133 = vector.broadcast %cst_47 : f32 to vector<24x1xf32>
    %134 = arith.addf %130, %133 : vector<24x1xf32>
    %135 = math.rsqrt %134 : vector<24x1xf32>
    %136 = vector.broadcast %135 : vector<24x1xf32> to vector<24x32xf32>
    %137 = arith.mulf %132, %136 : vector<24x32xf32>
    %138 = vector.broadcast %20 : vector<1x32xf32> to vector<24x32xf32>
    %139 = arith.mulf %137, %138 : vector<24x32xf32>
    %140 = vector.broadcast %21 : vector<1x32xf32> to vector<24x32xf32>
    %141 = arith.addf %139, %140 : vector<24x32xf32>
    %142 = arith.truncf %141 : vector<24x32xf32> to vector<24x32xbf16>
    %cst_48 = arith.constant dense<0.000000e+00> : vector<24x64xf32>
    %143 = tpu.matmul %142, %16, %cst_48 {dimension_numbers = #tpu.dot_dimension_numbers<[1], [0], [0], [1], [0, 0, 1, 1], [], []>} : vector<24x32xbf16>, vector<32x64xbf16>, vector<24x64xf32> -> vector<24x64xf32>
    %144 = vector.broadcast %22 : vector<1x64xf32> to vector<24x64xf32>
    %145 = arith.addf %143, %144 : vector<24x64xf32>
    %cst_49 = arith.constant 0.000000e+00 : f32
    %146 = vector.broadcast %cst_49 : f32 to vector<24x64xf32>
    %147 = arith.maximumf %145, %146 : vector<24x64xf32>
    %148 = arith.truncf %147 : vector<24x64xf32> to vector<24x64xbf16>
    %cst_50 = arith.constant dense<0.000000e+00> : vector<24x32xf32>
    %149 = tpu.matmul %148, %17, %cst_50 {dimension_numbers = #tpu.dot_dimension_numbers<[1], [0], [0], [1], [0, 0, 1, 1], [], []>} : vector<24x64xbf16>, vector<64x32xbf16>, vector<24x32xf32> -> vector<24x32xf32>
    %150 = vector.broadcast %23 : vector<1x32xf32> to vector<24x32xf32>
    %151 = arith.addf %149, %150 : vector<24x32xf32>
    %152 = arith.addf %141, %151 : vector<24x32xf32>
    %cst_51 = arith.constant dense<0.000000e+00> : vector<24xf32>
    %153 = vector.multi_reduction <add>, %152, %cst_51 [1] : vector<24x32xf32> to vector<24xf32>
    %154 = vector.shape_cast %153 : vector<24xf32> to vector<24x1xf32>
    %cst_52 = arith.constant 3.200000e+01 : f32
    %155 = vector.broadcast %cst_52 : f32 to vector<24x1xf32>
    %156 = arith.divf %154, %155 : vector<24x1xf32>
    %157 = vector.broadcast %156 : vector<24x1xf32> to vector<24x32xf32>
    %158 = arith.subf %152, %157 : vector<24x32xf32>
    %159 = arith.mulf %158, %158 : vector<24x32xf32>
    %cst_53 = arith.constant dense<0.000000e+00> : vector<24xf32>
    %160 = vector.multi_reduction <add>, %159, %cst_53 [1] : vector<24x32xf32> to vector<24xf32>
    %161 = vector.shape_cast %160 : vector<24xf32> to vector<24x1xf32>
    %cst_54 = arith.constant 3.200000e+01 : f32
    %162 = vector.broadcast %cst_54 : f32 to vector<24x1xf32>
    %163 = arith.divf %161, %162 : vector<24x1xf32>
    %164 = vector.broadcast %156 : vector<24x1xf32> to vector<24x32xf32>
    %165 = arith.subf %152, %164 : vector<24x32xf32>
    %cst_55 = arith.constant 9.99999974E-6 : f32
    %166 = vector.broadcast %cst_55 : f32 to vector<24x1xf32>
    %167 = arith.addf %163, %166 : vector<24x1xf32>
    %168 = math.rsqrt %167 : vector<24x1xf32>
    %169 = vector.broadcast %168 : vector<24x1xf32> to vector<24x32xf32>
    %170 = arith.mulf %165, %169 : vector<24x32xf32>
    %171 = vector.broadcast %24 : vector<1x32xf32> to vector<24x32xf32>
    %172 = arith.mulf %170, %171 : vector<24x32xf32>
    %173 = vector.broadcast %25 : vector<1x32xf32> to vector<24x32xf32>
    %174 = arith.addf %172, %173 : vector<24x32xf32>
    %c176 = arith.constant 176 : index
    %c0_56 = arith.constant 0 : index
    %175 = vector.load %arg1[%c176, %c0_56] : memref<368x128xbf16, #tpu.memory_space<vmem>>, vector<32x96xbf16>
    %c208 = arith.constant 208 : index
    %c0_57 = arith.constant 0 : index
    %176 = vector.load %arg1[%c208, %c0_57] : memref<368x128xbf16, #tpu.memory_space<vmem>>, vector<32x32xbf16>
    %c240 = arith.constant 240 : index
    %c0_58 = arith.constant 0 : index
    %177 = vector.load %arg1[%c240, %c0_58] : memref<368x128xbf16, #tpu.memory_space<vmem>>, vector<32x64xbf16>
    %c272 = arith.constant 272 : index
    %c0_59 = arith.constant 0 : index
    %178 = vector.load %arg1[%c272, %c0_59] : memref<368x128xbf16, #tpu.memory_space<vmem>>, vector<64x32xbf16>
    %c88 = arith.constant 88 : index
    %c0_60 = arith.constant 0 : index
    %179 = vector.load %arg2[%c88, %c0_60] : memref<160x128xf32, #tpu.memory_space<vmem>>, vector<1x96xf32>
    %c96 = arith.constant 96 : index
    %c0_61 = arith.constant 0 : index
    %180 = vector.load %arg2[%c96, %c0_61] : memref<160x128xf32, #tpu.memory_space<vmem>>, vector<1x32xf32>
    %c104 = arith.constant 104 : index
    %c0_62 = arith.constant 0 : index
    %181 = vector.load %arg2[%c104, %c0_62] : memref<160x128xf32, #tpu.memory_space<vmem>>, vector<1x32xf32>
    %c112_63 = arith.constant 112 : index
    %c0_64 = arith.constant 0 : index
    %182 = vector.load %arg2[%c112_63, %c0_64] : memref<160x128xf32, #tpu.memory_space<vmem>>, vector<1x32xf32>
    %c120 = arith.constant 120 : index
    %c0_65 = arith.constant 0 : index
    %183 = vector.load %arg2[%c120, %c0_65] : memref<160x128xf32, #tpu.memory_space<vmem>>, vector<1x64xf32>
    %c128 = arith.constant 128 : index
    %c0_66 = arith.constant 0 : index
    %184 = vector.load %arg2[%c128, %c0_66] : memref<160x128xf32, #tpu.memory_space<vmem>>, vector<1x32xf32>
    %c136 = arith.constant 136 : index
    %c0_67 = arith.constant 0 : index
    %185 = vector.load %arg2[%c136, %c0_67] : memref<160x128xf32, #tpu.memory_space<vmem>>, vector<1x32xf32>
    %c144 = arith.constant 144 : index
    %c0_68 = arith.constant 0 : index
    %186 = vector.load %arg2[%c144, %c0_68] : memref<160x128xf32, #tpu.memory_space<vmem>>, vector<1x32xf32>
    %187 = arith.truncf %174 : vector<24x32xf32> to vector<24x32xbf16>
    %cst_69 = arith.constant dense<0.000000e+00> : vector<24x96xf32>
    %188 = tpu.matmul %187, %175, %cst_69 {dimension_numbers = #tpu.dot_dimension_numbers<[1], [0], [0], [1], [0, 0, 1, 1], [], []>} : vector<24x32xbf16>, vector<32x96xbf16>, vector<24x96xf32> -> vector<24x96xf32>
    %189 = vector.broadcast %179 : vector<1x96xf32> to vector<24x96xf32>
    %190 = arith.addf %188, %189 : vector<24x96xf32>
    %191 = vector.extract_strided_slice %190 {offsets = [0, 0], sizes = [24, 8], strides = [1, 1]} : vector<24x96xf32> to vector<24x8xf32>
    %192 = arith.truncf %191 : vector<24x8xf32> to vector<24x8xbf16>
    %193 = vector.extract_strided_slice %190 {offsets = [0, 32], sizes = [24, 8], strides = [1, 1]} : vector<24x96xf32> to vector<24x8xf32>
    %194 = tpu.transpose %193, [1, 0] : vector<24x8xf32> -> vector<8x24xf32>
    %195 = vector.extract_strided_slice %190 {offsets = [0, 64], sizes = [24, 8], strides = [1, 1]} : vector<24x96xf32> to vector<24x8xf32>
    %196 = arith.truncf %194 : vector<8x24xf32> to vector<8x24xbf16>
    %cst_70 = arith.constant dense<0.000000e+00> : vector<24x24xf32>
    %197 = tpu.matmul %192, %196, %cst_70 {dimension_numbers = #tpu.dot_dimension_numbers<[1], [0], [0], [1], [0, 0, 1, 1], [], []>} : vector<24x8xbf16>, vector<8x24xbf16>, vector<24x24xf32> -> vector<24x24xf32>
    %cst_71 = arith.constant -1.000000e+30 : f32
    %198 = vector.broadcast %cst_71 : f32 to vector<24x24xf32>
    %199 = arith.select %13, %197, %198 : vector<24x24xi1>, vector<24x24xf32>
    %cst_72 = arith.constant dense<0xFF800000> : vector<24xf32>
    %200 = vector.multi_reduction <maximumf>, %199, %cst_72 [1] : vector<24x24xf32> to vector<24xf32>
    %201 = vector.shape_cast %200 : vector<24xf32> to vector<24x1xf32>
    %202 = vector.broadcast %201 : vector<24x1xf32> to vector<24x24xf32>
    %203 = arith.subf %199, %202 : vector<24x24xf32>
    %204 = math.exp %203 : vector<24x24xf32>
    %cst_73 = arith.constant dense<0.000000e+00> : vector<24xf32>
    %205 = vector.multi_reduction <add>, %204, %cst_73 [1] : vector<24x24xf32> to vector<24xf32>
    %206 = vector.shape_cast %205 : vector<24xf32> to vector<24x1xf32>
    %207 = vector.broadcast %206 : vector<24x1xf32> to vector<24x24xf32>
    %208 = arith.divf %204, %207 : vector<24x24xf32>
    %209 = arith.truncf %208 : vector<24x24xf32> to vector<24x24xbf16>
    %210 = arith.truncf %195 : vector<24x8xf32> to vector<24x8xbf16>
    %cst_74 = arith.constant dense<0.000000e+00> : vector<24x8xf32>
    %211 = tpu.matmul %209, %210, %cst_74 {dimension_numbers = #tpu.dot_dimension_numbers<[1], [0], [0], [1], [0, 0, 1, 1], [], []>} : vector<24x24xbf16>, vector<24x8xbf16>, vector<24x8xf32> -> vector<24x8xf32>
    %212 = vector.extract_strided_slice %190 {offsets = [0, 8], sizes = [24, 8], strides = [1, 1]} : vector<24x96xf32> to vector<24x8xf32>
    %213 = arith.truncf %212 : vector<24x8xf32> to vector<24x8xbf16>
    %214 = vector.extract_strided_slice %190 {offsets = [0, 40], sizes = [24, 8], strides = [1, 1]} : vector<24x96xf32> to vector<24x8xf32>
    %215 = tpu.transpose %214, [1, 0] : vector<24x8xf32> -> vector<8x24xf32>
    %216 = vector.extract_strided_slice %190 {offsets = [0, 72], sizes = [24, 8], strides = [1, 1]} : vector<24x96xf32> to vector<24x8xf32>
    %217 = arith.truncf %215 : vector<8x24xf32> to vector<8x24xbf16>
    %cst_75 = arith.constant dense<0.000000e+00> : vector<24x24xf32>
    %218 = tpu.matmul %213, %217, %cst_75 {dimension_numbers = #tpu.dot_dimension_numbers<[1], [0], [0], [1], [0, 0, 1, 1], [], []>} : vector<24x8xbf16>, vector<8x24xbf16>, vector<24x24xf32> -> vector<24x24xf32>
    %cst_76 = arith.constant -1.000000e+30 : f32
    %219 = vector.broadcast %cst_76 : f32 to vector<24x24xf32>
    %220 = arith.select %13, %218, %219 : vector<24x24xi1>, vector<24x24xf32>
    %cst_77 = arith.constant dense<0xFF800000> : vector<24xf32>
    %221 = vector.multi_reduction <maximumf>, %220, %cst_77 [1] : vector<24x24xf32> to vector<24xf32>
    %222 = vector.shape_cast %221 : vector<24xf32> to vector<24x1xf32>
    %223 = vector.broadcast %222 : vector<24x1xf32> to vector<24x24xf32>
    %224 = arith.subf %220, %223 : vector<24x24xf32>
    %225 = math.exp %224 : vector<24x24xf32>
    %cst_78 = arith.constant dense<0.000000e+00> : vector<24xf32>
    %226 = vector.multi_reduction <add>, %225, %cst_78 [1] : vector<24x24xf32> to vector<24xf32>
    %227 = vector.shape_cast %226 : vector<24xf32> to vector<24x1xf32>
    %228 = vector.broadcast %227 : vector<24x1xf32> to vector<24x24xf32>
    %229 = arith.divf %225, %228 : vector<24x24xf32>
    %230 = arith.truncf %229 : vector<24x24xf32> to vector<24x24xbf16>
    %231 = arith.truncf %216 : vector<24x8xf32> to vector<24x8xbf16>
    %cst_79 = arith.constant dense<0.000000e+00> : vector<24x8xf32>
    %232 = tpu.matmul %230, %231, %cst_79 {dimension_numbers = #tpu.dot_dimension_numbers<[1], [0], [0], [1], [0, 0, 1, 1], [], []>} : vector<24x24xbf16>, vector<24x8xbf16>, vector<24x8xf32> -> vector<24x8xf32>
    %233 = vector.extract_strided_slice %190 {offsets = [0, 16], sizes = [24, 8], strides = [1, 1]} : vector<24x96xf32> to vector<24x8xf32>
    %234 = arith.truncf %233 : vector<24x8xf32> to vector<24x8xbf16>
    %235 = vector.extract_strided_slice %190 {offsets = [0, 48], sizes = [24, 8], strides = [1, 1]} : vector<24x96xf32> to vector<24x8xf32>
    %236 = tpu.transpose %235, [1, 0] : vector<24x8xf32> -> vector<8x24xf32>
    %237 = vector.extract_strided_slice %190 {offsets = [0, 80], sizes = [24, 8], strides = [1, 1]} : vector<24x96xf32> to vector<24x8xf32>
    %238 = arith.truncf %236 : vector<8x24xf32> to vector<8x24xbf16>
    %cst_80 = arith.constant dense<0.000000e+00> : vector<24x24xf32>
    %239 = tpu.matmul %234, %238, %cst_80 {dimension_numbers = #tpu.dot_dimension_numbers<[1], [0], [0], [1], [0, 0, 1, 1], [], []>} : vector<24x8xbf16>, vector<8x24xbf16>, vector<24x24xf32> -> vector<24x24xf32>
    %cst_81 = arith.constant -1.000000e+30 : f32
    %240 = vector.broadcast %cst_81 : f32 to vector<24x24xf32>
    %241 = arith.select %13, %239, %240 : vector<24x24xi1>, vector<24x24xf32>
    %cst_82 = arith.constant dense<0xFF800000> : vector<24xf32>
    %242 = vector.multi_reduction <maximumf>, %241, %cst_82 [1] : vector<24x24xf32> to vector<24xf32>
    %243 = vector.shape_cast %242 : vector<24xf32> to vector<24x1xf32>
    %244 = vector.broadcast %243 : vector<24x1xf32> to vector<24x24xf32>
    %245 = arith.subf %241, %244 : vector<24x24xf32>
    %246 = math.exp %245 : vector<24x24xf32>
    %cst_83 = arith.constant dense<0.000000e+00> : vector<24xf32>
    %247 = vector.multi_reduction <add>, %246, %cst_83 [1] : vector<24x24xf32> to vector<24xf32>
    %248 = vector.shape_cast %247 : vector<24xf32> to vector<24x1xf32>
    %249 = vector.broadcast %248 : vector<24x1xf32> to vector<24x24xf32>
    %250 = arith.divf %246, %249 : vector<24x24xf32>
    %251 = arith.truncf %250 : vector<24x24xf32> to vector<24x24xbf16>
    %252 = arith.truncf %237 : vector<24x8xf32> to vector<24x8xbf16>
    %cst_84 = arith.constant dense<0.000000e+00> : vector<24x8xf32>
    %253 = tpu.matmul %251, %252, %cst_84 {dimension_numbers = #tpu.dot_dimension_numbers<[1], [0], [0], [1], [0, 0, 1, 1], [], []>} : vector<24x24xbf16>, vector<24x8xbf16>, vector<24x8xf32> -> vector<24x8xf32>
    %254 = vector.extract_strided_slice %190 {offsets = [0, 24], sizes = [24, 8], strides = [1, 1]} : vector<24x96xf32> to vector<24x8xf32>
    %255 = arith.truncf %254 : vector<24x8xf32> to vector<24x8xbf16>
    %256 = vector.extract_strided_slice %190 {offsets = [0, 56], sizes = [24, 8], strides = [1, 1]} : vector<24x96xf32> to vector<24x8xf32>
    %257 = tpu.transpose %256, [1, 0] : vector<24x8xf32> -> vector<8x24xf32>
    %258 = vector.extract_strided_slice %190 {offsets = [0, 88], sizes = [24, 8], strides = [1, 1]} : vector<24x96xf32> to vector<24x8xf32>
    %259 = arith.truncf %257 : vector<8x24xf32> to vector<8x24xbf16>
    %cst_85 = arith.constant dense<0.000000e+00> : vector<24x24xf32>
    %260 = tpu.matmul %255, %259, %cst_85 {dimension_numbers = #tpu.dot_dimension_numbers<[1], [0], [0], [1], [0, 0, 1, 1], [], []>} : vector<24x8xbf16>, vector<8x24xbf16>, vector<24x24xf32> -> vector<24x24xf32>
    %cst_86 = arith.constant -1.000000e+30 : f32
    %261 = vector.broadcast %cst_86 : f32 to vector<24x24xf32>
    %262 = arith.select %13, %260, %261 : vector<24x24xi1>, vector<24x24xf32>
    %cst_87 = arith.constant dense<0xFF800000> : vector<24xf32>
    %263 = vector.multi_reduction <maximumf>, %262, %cst_87 [1] : vector<24x24xf32> to vector<24xf32>
    %264 = vector.shape_cast %263 : vector<24xf32> to vector<24x1xf32>
    %265 = vector.broadcast %264 : vector<24x1xf32> to vector<24x24xf32>
    %266 = arith.subf %262, %265 : vector<24x24xf32>
    %267 = math.exp %266 : vector<24x24xf32>
    %cst_88 = arith.constant dense<0.000000e+00> : vector<24xf32>
    %268 = vector.multi_reduction <add>, %267, %cst_88 [1] : vector<24x24xf32> to vector<24xf32>
    %269 = vector.shape_cast %268 : vector<24xf32> to vector<24x1xf32>
    %270 = vector.broadcast %269 : vector<24x1xf32> to vector<24x24xf32>
    %271 = arith.divf %267, %270 : vector<24x24xf32>
    %272 = arith.truncf %271 : vector<24x24xf32> to vector<24x24xbf16>
    %273 = arith.truncf %258 : vector<24x8xf32> to vector<24x8xbf16>
    %cst_89 = arith.constant dense<0.000000e+00> : vector<24x8xf32>
    %274 = tpu.matmul %272, %273, %cst_89 {dimension_numbers = #tpu.dot_dimension_numbers<[1], [0], [0], [1], [0, 0, 1, 1], [], []>} : vector<24x24xbf16>, vector<24x8xbf16>, vector<24x8xf32> -> vector<24x8xf32>
    %275 = tpu.concatenate %211, %232, %253, %274 in 1 : vector<24x8xf32>, vector<24x8xf32>, vector<24x8xf32>, vector<24x8xf32> -> vector<24x32xf32>
    %276 = arith.truncf %275 : vector<24x32xf32> to vector<24x32xbf16>
    %cst_90 = arith.constant dense<0.000000e+00> : vector<24x32xf32>
    %277 = tpu.matmul %276, %176, %cst_90 {dimension_numbers = #tpu.dot_dimension_numbers<[1], [0], [0], [1], [0, 0, 1, 1], [], []>} : vector<24x32xbf16>, vector<32x32xbf16>, vector<24x32xf32> -> vector<24x32xf32>
    %278 = vector.broadcast %180 : vector<1x32xf32> to vector<24x32xf32>
    %279 = arith.addf %277, %278 : vector<24x32xf32>
    %280 = arith.addf %174, %279 : vector<24x32xf32>
    %cst_91 = arith.constant dense<0.000000e+00> : vector<24xf32>
    %281 = vector.multi_reduction <add>, %280, %cst_91 [1] : vector<24x32xf32> to vector<24xf32>
    %282 = vector.shape_cast %281 : vector<24xf32> to vector<24x1xf32>
    %cst_92 = arith.constant 3.200000e+01 : f32
    %283 = vector.broadcast %cst_92 : f32 to vector<24x1xf32>
    %284 = arith.divf %282, %283 : vector<24x1xf32>
    %285 = vector.broadcast %284 : vector<24x1xf32> to vector<24x32xf32>
    %286 = arith.subf %280, %285 : vector<24x32xf32>
    %287 = arith.mulf %286, %286 : vector<24x32xf32>
    %cst_93 = arith.constant dense<0.000000e+00> : vector<24xf32>
    %288 = vector.multi_reduction <add>, %287, %cst_93 [1] : vector<24x32xf32> to vector<24xf32>
    %289 = vector.shape_cast %288 : vector<24xf32> to vector<24x1xf32>
    %cst_94 = arith.constant 3.200000e+01 : f32
    %290 = vector.broadcast %cst_94 : f32 to vector<24x1xf32>
    %291 = arith.divf %289, %290 : vector<24x1xf32>
    %292 = vector.broadcast %284 : vector<24x1xf32> to vector<24x32xf32>
    %293 = arith.subf %280, %292 : vector<24x32xf32>
    %cst_95 = arith.constant 9.99999974E-6 : f32
    %294 = vector.broadcast %cst_95 : f32 to vector<24x1xf32>
    %295 = arith.addf %291, %294 : vector<24x1xf32>
    %296 = math.rsqrt %295 : vector<24x1xf32>
    %297 = vector.broadcast %296 : vector<24x1xf32> to vector<24x32xf32>
    %298 = arith.mulf %293, %297 : vector<24x32xf32>
    %299 = vector.broadcast %181 : vector<1x32xf32> to vector<24x32xf32>
    %300 = arith.mulf %298, %299 : vector<24x32xf32>
    %301 = vector.broadcast %182 : vector<1x32xf32> to vector<24x32xf32>
    %302 = arith.addf %300, %301 : vector<24x32xf32>
    %303 = arith.truncf %302 : vector<24x32xf32> to vector<24x32xbf16>
    %cst_96 = arith.constant dense<0.000000e+00> : vector<24x64xf32>
    %304 = tpu.matmul %303, %177, %cst_96 {dimension_numbers = #tpu.dot_dimension_numbers<[1], [0], [0], [1], [0, 0, 1, 1], [], []>} : vector<24x32xbf16>, vector<32x64xbf16>, vector<24x64xf32> -> vector<24x64xf32>
    %305 = vector.broadcast %183 : vector<1x64xf32> to vector<24x64xf32>
    %306 = arith.addf %304, %305 : vector<24x64xf32>
    %cst_97 = arith.constant 0.000000e+00 : f32
    %307 = vector.broadcast %cst_97 : f32 to vector<24x64xf32>
    %308 = arith.maximumf %306, %307 : vector<24x64xf32>
    %309 = arith.truncf %308 : vector<24x64xf32> to vector<24x64xbf16>
    %cst_98 = arith.constant dense<0.000000e+00> : vector<24x32xf32>
    %310 = tpu.matmul %309, %178, %cst_98 {dimension_numbers = #tpu.dot_dimension_numbers<[1], [0], [0], [1], [0, 0, 1, 1], [], []>} : vector<24x64xbf16>, vector<64x32xbf16>, vector<24x32xf32> -> vector<24x32xf32>
    %311 = vector.broadcast %184 : vector<1x32xf32> to vector<24x32xf32>
    %312 = arith.addf %310, %311 : vector<24x32xf32>
    %313 = arith.addf %302, %312 : vector<24x32xf32>
    %cst_99 = arith.constant dense<0.000000e+00> : vector<24xf32>
    %314 = vector.multi_reduction <add>, %313, %cst_99 [1] : vector<24x32xf32> to vector<24xf32>
    %315 = vector.shape_cast %314 : vector<24xf32> to vector<24x1xf32>
    %cst_100 = arith.constant 3.200000e+01 : f32
    %316 = vector.broadcast %cst_100 : f32 to vector<24x1xf32>
    %317 = arith.divf %315, %316 : vector<24x1xf32>
    %318 = vector.broadcast %317 : vector<24x1xf32> to vector<24x32xf32>
    %319 = arith.subf %313, %318 : vector<24x32xf32>
    %320 = arith.mulf %319, %319 : vector<24x32xf32>
    %cst_101 = arith.constant dense<0.000000e+00> : vector<24xf32>
    %321 = vector.multi_reduction <add>, %320, %cst_101 [1] : vector<24x32xf32> to vector<24xf32>
    %322 = vector.shape_cast %321 : vector<24xf32> to vector<24x1xf32>
    %cst_102 = arith.constant 3.200000e+01 : f32
    %323 = vector.broadcast %cst_102 : f32 to vector<24x1xf32>
    %324 = arith.divf %322, %323 : vector<24x1xf32>
    %325 = vector.broadcast %317 : vector<24x1xf32> to vector<24x32xf32>
    %326 = arith.subf %313, %325 : vector<24x32xf32>
    %cst_103 = arith.constant 9.99999974E-6 : f32
    %327 = vector.broadcast %cst_103 : f32 to vector<24x1xf32>
    %328 = arith.addf %324, %327 : vector<24x1xf32>
    %329 = math.rsqrt %328 : vector<24x1xf32>
    %330 = vector.broadcast %329 : vector<24x1xf32> to vector<24x32xf32>
    %331 = arith.mulf %326, %330 : vector<24x32xf32>
    %332 = vector.broadcast %185 : vector<1x32xf32> to vector<24x32xf32>
    %333 = arith.mulf %331, %332 : vector<24x32xf32>
    %334 = vector.broadcast %186 : vector<1x32xf32> to vector<24x32xf32>
    %335 = arith.addf %333, %334 : vector<24x32xf32>
    %336 = vector.extract_strided_slice %335 {offsets = [11, 0], sizes = [1, 32], strides = [1, 1]} : vector<24x32xf32> to vector<1x32xf32>
    %337 = vector.extract_strided_slice %335 {offsets = [23, 0], sizes = [1, 32], strides = [1, 1]} : vector<24x32xf32> to vector<1x32xf32>
    %338 = tpu.concatenate %336, %337 in 0 : vector<1x32xf32>, vector<1x32xf32> -> vector<2x32xf32>
    %c336 = arith.constant 336 : index
    %c0_104 = arith.constant 0 : index
    %339 = vector.load %arg1[%c336, %c0_104] : memref<368x128xbf16, #tpu.memory_space<vmem>>, vector<32x3xbf16>
    %c152 = arith.constant 152 : index
    %c0_105 = arith.constant 0 : index
    %340 = vector.load %arg2[%c152, %c0_105] : memref<160x128xf32, #tpu.memory_space<vmem>>, vector<1x3xf32>
    %341 = arith.truncf %338 : vector<2x32xf32> to vector<2x32xbf16>
    %cst_106 = arith.constant dense<0.000000e+00> : vector<2x3xf32>
    %342 = tpu.matmul %341, %339, %cst_106 {dimension_numbers = #tpu.dot_dimension_numbers<[1], [0], [0], [1], [0, 0, 1, 1], [], []>} : vector<2x32xbf16>, vector<32x3xbf16>, vector<2x3xf32> -> vector<2x3xf32>
    %343 = vector.broadcast %340 : vector<1x3xf32> to vector<2x3xf32>
    %344 = arith.addf %342, %343 : vector<2x3xf32>
    %c0_107 = arith.constant 0 : index
    %c0_108 = arith.constant 0 : index
    %345 = vector.load %arg3[%c0_107, %c0_108] : memref<2x3xf32, #tpu.memory_space<vmem>>, vector<2x3xf32>
    tpu.vector_store %arg3[%c0_107, %c0_108], %344 {strides = array<i32>} : memref<2x3xf32, #tpu.memory_space<vmem>>, vector<2x3xf32>,
    return
  }
}

</mosaic_0001>

<llo_original>
// kernel: tpu_custom_call.1
$region0: #{tpu_custom_call.1}
  #allocation0 [shape = 'u32[]', space=smem, size = 0x4, offset = 0x4, fixed_abs, tag = 'smem constant byte address 0x4 - core index']
  #allocation1 [shape = 'u32[72,128]{1,0:T(1,128)}', space=vmem, size = 0x9000, scoped, tag = 'internal scratch']
  %s0 = inlined_call_operand.vmem [shape: f32[24,4], index: 0, kind: input, shape index: {}]
  %s1 = inlined_call_operand.hbm [shape: bf16[368,128], index: 1, kind: input, shape index: {}]
  %s2 = inlined_call_operand.hbm [shape: f32[160,128], index: 2, kind: input, shape index: {}]
  %s3 = inlined_call_operand.hbm [shape: f32[2,3], index: 3, kind: output, shape index: {}]
  %s4 = sld [smem:[#allocation0]]
  $region30: #{tpu_custom_call.1} parent=0
    _
  %s6 = ssub.s32 1, %s4
  %s7 = scalar_select 0, %s6, %s4
  $region1: #{tpu_custom_call.1} parent=0
    #allocation2 [shape = 'u8[94208]{0}', space=vmem, size = 0x17000, scoped, tag = 'input window, operand 1, single buffered']
    #allocation3 [shape = 's32[1]{0}', space=sflag, size = 0x4, scoped, tag = 'scoped memory for tpu_custom_call.1']
    #allocation4 [shape = 's32[1]{0}', space=sflag, size = 0x4, scoped, tag = 'scoped memory for tpu_custom_call.1']
    #allocation5 [shape = 'u8[81920]{0}', space=vmem, size = 0x14000, scoped, tag = 'input window, operand 2, single buffered']
    #allocation6 [shape = 's32[1]{0}', space=sflag, size = 0x4, scoped, tag = 'scoped memory for tpu_custom_call.1']
    #allocation7 [shape = 'u8[1024]{0}', space=vmem, size = 0x400, scoped, tag = 'output window, operand 0, single buffered']
    %8 = vsyncpa [#allocation3], 0
    %9 = vsyncpa [#allocation6], 0
    %10 = vsyncpa [#allocation4], 0
    // Predicated region
    $region2: #{tpu_custom_call.1} parent=1 // pred_check
      _
    $region3: #{tpu_custom_call.1} parent=1 // pred_check_branch
      %12 = sbr.rel (0) target = $region5
    $region4: #{tpu_custom_call.1} parent=1 // pred_region
      _
    $region5: #{tpu_custom_call.1} parent=1 // pred_fallthru
      _
    // Predicated region
    $region6: #{tpu_custom_call.1} parent=1 // pred_check
      _
    $region7: #{tpu_custom_call.1} parent=1 // pred_check_branch
      %14 = sbr.rel (0) target = $region9
    $region8: #{tpu_custom_call.1} parent=1 // pred_region
      %16 = vsyncadd [#allocation3], 0
      %s17 = sshll.u32 %s1, 4
      %s18 = int_to_ptr.hbm [resolvable:$true] %s17
      %s19 = sshll.u32 [#allocation2], 4
      %s20 = int_to_ptr.vmem [resolvable:$true] %s19
      %25 = dma.hbm_to_vmem [thread:$0]  %s18, 2944, %s20, [#allocation3], 64, 64, 4
    $region9: #{tpu_custom_call.1} parent=1 // pred_fallthru
      _
    // Predicated region
    $region10: #{tpu_custom_call.1} parent=1 // pred_check
      _
    $region11: #{tpu_custom_call.1} parent=1 // pred_check_branch
      %27 = sbr.rel (0) target = $region13
    $region12: #{tpu_custom_call.1} parent=1 // pred_region
      %29 = vsyncadd [#allocation6], 0
      %s30 = sshll.u32 %s2, 4
      %s31 = int_to_ptr.hbm [resolvable:$true] %s30
      %s32 = sshll.u32 [#allocation5], 4
      %s33 = int_to_ptr.vmem [resolvable:$true] %s32
      %38 = dma.hbm_to_vmem [thread:$0]  %s31, 2560, %s33, [#allocation6], 128, 128, 8
    $region13: #{tpu_custom_call.1} parent=1 // pred_fallthru
      _
    // Predicated region
    $region14: #{tpu_custom_call.1} parent=1 // pred_check
      _
    $region15: #{tpu_custom_call.1} parent=1 // pred_check_branch
      %40 = sbr.rel (0) target = $region17
    $region16: #{tpu_custom_call.1} parent=1 // pred_region
      %42 = dma.done [#allocation3], 2944
    $region17: #{tpu_custom_call.1} parent=1 // pred_fallthru
      _
    // Predicated region
    $region18: #{tpu_custom_call.1} parent=1 // pred_check
      _
    $region19: #{tpu_custom_call.1} parent=1 // pred_check_branch
      %44 = sbr.rel (0) target = $region21
    $region20: #{tpu_custom_call.1} parent=1 // pred_region
      %46 = dma.done [#allocation6], 2560
    $region21: #{tpu_custom_call.1} parent=1 // pred_fallthru
      _
    %v48 = vld [vmem:[%s0] sm:$0xff]
    %v49 = vld [vmem:[%s0 + $0x8] sm:$0xff]
    %v50 = vld [vmem:[%s0 + $0x10] sm:$0xff]
    %v51 = vpack.c.bf16 %v49, %v48
    %v52 = vpack.c.bf16 %v50, %v50
    %v53 = vld [vmem:[#allocation2] sm:$0x3]
    %v54 = vld [vmem:[#allocation5] sm:$0xff]
    %v55 = vld [vmem:[#allocation5 + $0x8] sm:$0xff]
    %v56 = vld [vmem:[#allocation5 + $0x10] sm:$0xff]
    %vm57 = vcmask 31744
    %v59 = vsel %vm57, %v51, 0
    %v62 = vsel %vm57, %v52, 0
    %vm64 = vcmask 1041408
    %v66 = vsel %vm64, %v53, 0
    %68 = vmatpush.bf16.msra.mxu0 0
    %69 = vmatpush.bf16.msra.mxu0 0
    %70 = vmatpush.bf16.msra.mxu0 0
    %71 = vmatpush.bf16.msra.mxu0 0
    %72 = vmatpush.bf16.msra.mxu0 0
    %73 = vmatpush.bf16.msra.mxu0 0
    %74 = vmatpush.bf16.msra.mxu0 0
    %75 = vmatpush.bf16.msra.mxu0 %v66
    %76 = vmatmul.bf16.gmra.mxu0 %v59
    %v77 = vpop.f32.mrf.mxu0
    %v78 = vadd.f32 %v54, %v77
    %v79 = vpop.f32.mrf.mxu0
    %v80 = vadd.f32 %v55, %v79
    %81 = vmatmul.bf16.gmra.mxu0 %v62
    %v82 = vpop.f32.mrf.mxu0
    %v83 = vadd.f32 %v56, %v82
    %v84 = vpop.f32.mrf.mxu0
    %85 = vdwg.mxu0
    %v86 = vlaneseq
    %v87 = vshrl.u32 %v86, 7
    %v88 = vadd.s32 %v87, 8
    %v89 = vadd.s32 %v87, 16
    %v90 = vlaneseq
    %v91 = vand.u32 %v90, 127
    %vm92 = vcmp.lt.s32.totalorder %v87, 12
    %vm93 = vcmp.lt.s32.totalorder %v88, 12
    %vm94 = vcmp.lt.s32.totalorder %v89, 12
    %vm95 = vcmp.lt.s32.totalorder %v91, 12
    %vm96 = vmxor %vm92, %vm95
    %vm97 = vmxor %vm93, %vm95
    %vm98 = vmxor %vm94, %vm95
    %vm99 = vmxor %vm96, 1
    %vm100 = vmxor %vm97, 1
    %vm101 = vmxor %vm98, 1
    %v102 = vld [vmem:[#allocation2 + $0x8] sm:$0xf]
    %v103 = vld [vmem:[#allocation2 + $0xc] sm:$0xf]
    %v104 = vld [vmem:[#allocation2 + $0x10] sm:$0xf]
    %v105 = vld [vmem:[#allocation2 + $0x14] sm:$0xf]
    %v106 = vld [vmem:[#allocation2 + $0x18] sm:$0xf]
    %v107 = vld [vmem:[#allocation2 + $0x1c] sm:$0xf]
    %v108 = vld [vmem:[#allocation2 + $0x20] sm:$0xf]
    %v109 = vld [vmem:[#allocation2 + $0x24] sm:$0xf]
    %v110 = vld [vmem:[#allocation2 + $0x28] sm:$0xf]
    %v111 = vld [vmem:[#allocation2 + $0x2c] sm:$0xf]
    %v112 = vld [vmem:[#allocation2 + $0x30] sm:$0xf]
    %v113 = vld [vmem:[#allocation2 + $0x34] sm:$0xf]
    %v114 = vld [vmem:[#allocation2 + $0x38] sm:$0xf]
    %v115 = vld [vmem:[#allocation2 + $0x3c] sm:$0xf]
    %v116 = vld [vmem:[#allocation2 + $0x40] sm:$0xf]
    %v117 = vld [vmem:[#allocation2 + $0x44] sm:$0xf]
    %v118 = vld [vmem:[#allocation2 + $0x48] sm:$0xf]
    %v119 = vld [vmem:[#allocation2 + $0x4c] sm:$0xf]
    %v120 = vld [vmem:[#allocation2 + $0x50] sm:$0xf]
    %v121 = vld [vmem:[#allocation2 + $0x54] sm:$0xf]
    %v122 = vld [vmem:[#allocation5 + $0x18] sm:$0x1]
    %v123 = vld [vmem:[#allocation5 + $0x20] sm:$0x1]
    %v124 = vld [vmem:[#allocation5 + $0x28] sm:$0x1]
    %v125 = vld [vmem:[#allocation5 + $0x30] sm:$0x1]
    %v126 = vld [vmem:[#allocation5 + $0x38] sm:$0x1]
    %v127 = vld [vmem:[#allocation5 + $0x40] sm:$0x1]
    %v128 = vld [vmem:[#allocation5 + $0x48] sm:$0x1]
    %v129 = vld [vmem:[#allocation5 + $0x50] sm:$0x1]
    %v130 = vpack.c.bf16 %v80, %v78
    %v131 = vpack.c.bf16 %v83, %v83
    %v132 = vperm.slane %v122, 0
    %v137 = vunpack.c.l.b16 %v102
    %v138 = vunpack.c.l.b16 %v103
    %v139 = vunpack.c.l.b16 %v104
    %v140 = vunpack.c.l.b16 %v105
    %v141 = vpack.c.b16 %v138, %v137
    %v142 = vpack.c.b16 %v140, %v139
    %vm145 = vcmask 261120
    %v147 = vsel %vm145, %v130, 0
    %v150 = vsel %vm145, %v131, 0
    %152 = vmatpush.bf16.msra.mxu0 0
    %153 = vmatpush.bf16.msra.mxu0 0
    %154 = vmatpush.bf16.msra.mxu0 0
    %155 = vmatpush.bf16.msra.mxu0 0
    %156 = vmatpush.bf16.msra.mxu0 0
    %157 = vmatpush.bf16.msra.mxu0 0
    %158 = vmatpush.bf16.msra.mxu0 %v142
    %159 = vmatpush.bf16.msra.mxu0 %v141
    %160 = vmatmul.bf16.gmra.mxu0 %v147
    %v161 = vpop.f32.mrf.mxu0
    %v162 = vadd.f32 %v132, %v161
    %v163 = vpop.f32.mrf.mxu0
    %v164 = vadd.f32 %v132, %v163
    %165 = vmatmul.bf16.gmra.mxu0 %v150
    %v166 = vpop.f32.mrf.mxu0
    %v167 = vadd.f32 %v132, %v166
    %v168 = vpop.f32.mrf.mxu0
    %169 = vdwg.mxu0
    %v170 = vpack.c.bf16 %v164, %v162
    %v171 = vpack.c.bf16 %v167, %v167
    %175 = vrot.lane.b32.xlu0 %v162, 96
    %v176 = vpop.permute.xlu0 %175
    %177 = vrot.lane.b32.xlu0 %v164, 96
    %v178 = vpop.permute.xlu0 %177
    %179 = vrot.lane.b32.xlu0 %v167, 96
    %v180 = vpop.permute.xlu0 %179
    %184 = vxpose.xlu0.b32.start [1/16] %v176, 128
    %185 = vxpose.xlu0.b32.cont [2/16] %v178, 128
    %186 = vxpose.xlu0.b32.cont [3/16] %v180, 128
    %187 = vxpose.xlu0.b32.cont [4/16] 0.0, 128
    %188 = vxpose.xlu0.b32.cont [5/16] 0.0, 128
    %189 = vxpose.xlu0.b32.cont [6/16] 0.0, 128
    %190 = vxpose.xlu0.b32.cont [7/16] 0.0, 128
    %191 = vxpose.xlu0.b32.cont [8/16] 0.0, 128
    %192 = vxpose.xlu0.b32.cont [9/16] 0.0, 128
    %193 = vxpose.xlu0.b32.cont [10/16] 0.0, 128
    %194 = vxpose.xlu0.b32.cont [11/16] 0.0, 128
    %195 = vxpose.xlu0.b32.cont [12/16] 0.0, 128
    %196 = vxpose.xlu0.b32.cont [13/16] 0.0, 128
    %197 = vxpose.xlu0.b32.cont [14/16] 0.0, 128
    %198 = vxpose.xlu0.b32.cont [15/16] 0.0, 128
    %199 = vxpose.xlu0.b32.end [16/16] 0.0, 128
    %v200 = vpop.trf.xlu0
    %v201 = vpop.trf.xlu0
    %v202 = vpop.trf.xlu0
    %v203 = vpop.trf.xlu0
    %v204 = vpop.trf.xlu0
    %v205 = vpop.trf.xlu0
    %v206 = vpop.trf.xlu0
    %v207 = vpop.trf.xlu0
    %v208 = vpop.trf.xlu0
    %v209 = vpop.trf.xlu0
    %v210 = vpop.trf.xlu0
    %v211 = vpop.trf.xlu0
    %v212 = vpop.trf.xlu0
    %v213 = vpop.trf.xlu0
    %v214 = vpop.trf.xlu0
    %v215 = vpop.trf.xlu0
    %v216 = vpack.c.bf16 %v200, %v200
    %vm217 = vcmask 64512
    %v219 = vsel %vm217, %v170, 0
    %v222 = vsel %vm217, %v171, 0
    %vm224 = vcmask 1043456
    %v226 = vsel %vm224, %v216, 0
    %228 = vmatpush.bf16.msra.mxu0 0
    %229 = vmatpush.bf16.msra.mxu0 0
    %230 = vmatpush.bf16.msra.mxu0 0
    %231 = vmatpush.bf16.msra.mxu0 0
    %232 = vmatpush.bf16.msra.mxu0 0
    %233 = vmatpush.bf16.msra.mxu0 0
    %234 = vmatpush.bf16.msra.mxu0 0
    %235 = vmatpush.bf16.msra.mxu0 %v226
    %236 = vmatmul.bf16.gmra.mxu0 %v219
    %v237 = vpop.f32.mrf.mxu0
    %v238 = vadd.f32 0.0, %v237
    %v239 = vpop.f32.mrf.mxu0
    %v240 = vadd.f32 0.0, %v239
    %241 = vmatmul.bf16.gmra.mxu0 %v222
    %v242 = vpop.f32.mrf.mxu0
    %v243 = vadd.f32 0.0, %v242
    %v244 = vpop.f32.mrf.mxu0
    %245 = vdwg.mxu0
    %v246 = vsel %vm99, %v238, -1e+30
    %v247 = vsel %vm100, %v240, -1e+30
    %v248 = vsel %vm101, %v243, -1e+30
    %vm249 = vcmask 195584
    %v250 = vsel %vm249, %v246, -inf
    %251 = vmax.xlane.f32.xlu0 %v250
    %v252 = vpop.xlane.xlu0 %251
    %v253 = vsel %vm249, %v247, -inf
    %254 = vmax.xlane.f32.xlu0 %v253
    %v255 = vpop.xlane.xlu0 %254
    %v256 = vsel %vm249, %v248, -inf
    %257 = vmax.xlane.f32.xlu0 %v256
    %v258 = vpop.xlane.xlu0 %257
    %v259 = vsub.f32 %v246, %v252
    %v260 = vsub.f32 %v247, %v255
    %v261 = vsub.f32 %v248, %v258
    %v262 = vmul.f32 %v259, 1.442695
    %v263 = vpow.pop %v262
    %v264 = vmul.f32 %v260, 1.442695
    %v265 = vpow.pop %v264
    %v266 = vmul.f32 %v261, 1.442695
    %v267 = vpow.pop %v266
    %v268 = vsel %vm249, %v263, 0.0
    %269 = vadd.xlane.f32.xlu0 %v268
    %v270 = vpop.xlane.xlu0 %269
    %v271 = vsel %vm249, %v265, 0.0
    %272 = vadd.xlane.f32.xlu0 %v271
    %v273 = vpop.xlane.xlu0 %272
    %v274 = vsel %vm249, %v267, 0.0
    %275 = vadd.xlane.f32.xlu0 %v274
    %v276 = vpop.xlane.xlu0 %275
    %v277 = vrcp.pop %v270
    %v278 = vmul.f32 %v270, %v277
    %v279 = vsub.f32 1.0, %v278
    %v280 = vmul.f32 %v277, %v279
    %v281 = vadd.f32 %v277, %v280
    %vm282 = vweird.f32 %v270
    %vm283 = vweird.f32 %v277
    %vm284 = vmor %vm282, %vm283
    %v285 = vsel %vm284, %v277, %v281
    %v286 = vand.u32 2147483647, %v270
    %vm287 = vcmp.eq.f32.partialorder %v286, 8.507059e+37
    %v288 = vand.u32 %v270, 2147483648
    %v289 = vor.u32 1.1754944e-38, %v288
    %v290 = vsel %vm287, %v289, %v285
    %v291 = vmul.f32 %v263, %v290
    %v292 = vrcp.pop %v273
    %v293 = vmul.f32 %v273, %v292
    %v294 = vsub.f32 1.0, %v293
    %v295 = vmul.f32 %v292, %v294
    %v296 = vadd.f32 %v292, %v295
    %vm297 = vweird.f32 %v273
    %vm298 = vweird.f32 %v292
    %vm299 = vmor %vm297, %vm298
    %v300 = vsel %vm299, %v292, %v296
    %v301 = vand.u32 2147483647, %v273
    %vm302 = vcmp.eq.f32.partialorder %v301, 8.507059e+37
    %v303 = vand.u32 %v273, 2147483648
    %v304 = vor.u32 1.1754944e-38, %v303
    %v305 = vsel %vm302, %v304, %v300
    %v306 = vmul.f32 %v265, %v305
    %v307 = vrcp.pop %v276
    %v308 = vmul.f32 %v276, %v307
    %v309 = vsub.f32 1.0, %v308
    %v310 = vmul.f32 %v307, %v309
    %v311 = vadd.f32 %v307, %v310
    %vm312 = vweird.f32 %v276
    %vm313 = vweird.f32 %v307
    %vm314 = vmor %vm312, %vm313
    %v315 = vsel %vm314, %v307, %v311
    %v316 = vand.u32 2147483647, %v276
    %vm317 = vcmp.eq.f32.partialorder %v316, 8.507059e+37
    %v318 = vand.u32 %v276, 2147483648
    %v319 = vor.u32 1.1754944e-38, %v318
    %v320 = vsel %vm317, %v319, %v315
    %v321 = vmul.f32 %v267, %v320
    %v322 = vpack.c.bf16 %v306, %v291
    %v323 = vpack.c.bf16 %v321, %v321
    %326 = vrot.lane.b32.xlu0 %v170, 64
    %v327 = vpop.permute.xlu0 %326
    %328 = vrot.lane.b32.xlu0 %v171, 64
    %v329 = vpop.permute.xlu0 %328
    %v332 = vsel %vm249, %v322, 0
    %v335 = vsel %vm249, %v323, 0
    %v338 = vsel %vm224, %v329, 0
    %340 = vmatpush.bf16.msra.mxu0 0
    %341 = vmatpush.bf16.msra.mxu0 0
    %342 = vmatpush.bf16.msra.mxu0 0
    %343 = vmatpush.bf16.msra.mxu0 0
    %344 = vmatpush.bf16.msra.mxu0 0
    %345 = vmatpush.bf16.msra.mxu0 0
    %346 = vmatpush.bf16.msra.mxu0 %v338
    %347 = vmatpush.bf16.msra.mxu0 %v327
    %348 = vmatmul.bf16.gmra.mxu0 %v332
    %v349 = vpop.f32.mrf.mxu0
    %v350 = vadd.f32 0.0, %v349
    %v351 = vpop.f32.mrf.mxu0
    %v352 = vadd.f32 0.0, %v351
    %353 = vmatmul.bf16.gmra.mxu0 %v335
    %v354 = vpop.f32.mrf.mxu0
    %v355 = vadd.f32 0.0, %v354
    %v356 = vpop.f32.mrf.mxu0
    %357 = vdwg.mxu0
    %358 = vrot.lane.b32.xlu0 %v162, 88
    %v359 = vpop.permute.xlu0 %358
    %360 = vrot.lane.b32.xlu0 %v164, 88
    %v361 = vpop.permute.xlu0 %360
    %362 = vrot.lane.b32.xlu0 %v167, 88
    %v363 = vpop.permute.xlu0 %362
    %367 = vxpose.xlu0.b32.start [1/16] %v359, 128
    %368 = vxpose.xlu0.b32.cont [2/16] %v361, 128
    %369 = vxpose.xlu0.b32.cont [3/16] %v363, 128
    %370 = vxpose.xlu0.b32.cont [4/16] 0.0, 128
    %371 = vxpose.xlu0.b32.cont [5/16] 0.0, 128
    %372 = vxpose.xlu0.b32.cont [6/16] 0.0, 128
    %373 = vxpose.xlu0.b32.cont [7/16] 0.0, 128
    %374 = vxpose.xlu0.b32.cont [8/16] 0.0, 128
    %375 = vxpose.xlu0.b32.cont [9/16] 0.0, 128
    %376 = vxpose.xlu0.b32.cont [10/16] 0.0, 128
    %377 = vxpose.xlu0.b32.cont [11/16] 0.0, 128
    %378 = vxpose.xlu0.b32.cont [12/16] 0.0, 128
    %379 = vxpose.xlu0.b32.cont [13/16] 0.0, 128
    %380 = vxpose.xlu0.b32.cont [14/16] 0.0, 128
    %381 = vxpose.xlu0.b32.cont [15/16] 0.0, 128
    %382 = vxpose.xlu0.b32.end [16/16] 0.0, 128
    %v383 = vpop.trf.xlu0
    %v384 = vpop.trf.xlu0
    %v385 = vpop.trf.xlu0
    %v386 = vpop.trf.xlu0
    %v387 = vpop.trf.xlu0
    %v388 = vpop.trf.xlu0
    %v389 = vpop.trf.xlu0
    %v390 = vpop.trf.xlu0
    %v391 = vpop.trf.xlu0
    %v392 = vpop.trf.xlu0
    %v393 = vpop.trf.xlu0
    %v394 = vpop.trf.xlu0
    %v395 = vpop.trf.xlu0
    %v396 = vpop.trf.xlu0
    %v397 = vpop.trf.xlu0
    %v398 = vpop.trf.xlu0
    %v399 = vpack.c.bf16 %v383, %v383
    %400 = vrot.lane.b32.xlu0 %v170, 120
    %v401 = vpop.permute.xlu0 %400
    %402 = vrot.lane.b32.xlu0 %v171, 120
    %v403 = vpop.permute.xlu0 %402
    %v405 = vsel %vm217, %v401, 0
    %v408 = vsel %vm217, %v403, 0
    %v411 = vsel %vm224, %v399, 0
    %413 = vmatpush.bf16.msra.mxu0 0
    %414 = vmatpush.bf16.msra.mxu0 0
    %415 = vmatpush.bf16.msra.mxu0 0
    %416 = vmatpush.bf16.msra.mxu0 0
    %417 = vmatpush.bf16.msra.mxu0 0
    %418 = vmatpush.bf16.msra.mxu0 0
    %419 = vmatpush.bf16.msra.mxu0 0
    %420 = vmatpush.bf16.msra.mxu0 %v411
    %421 = vmatmul.bf16.gmra.mxu0 %v405
    %v422 = vpop.f32.mrf.mxu0
    %v423 = vadd.f32 0.0, %v422
    %v424 = vpop.f32.mrf.mxu0
    %v425 = vadd.f32 0.0, %v424
    %426 = vmatmul.bf16.gmra.mxu0 %v408
    %v427 = vpop.f32.mrf.mxu0
    %v428 = vadd.f32 0.0, %v427
    %v429 = vpop.f32.mrf.mxu0
    %430 = vdwg.mxu0
    %v431 = vsel %vm99, %v423, -1e+30
    %v432 = vsel %vm100, %v425, -1e+30
    %v433 = vsel %vm101, %v428, -1e+30
    %v434 = vsel %vm249, %v431, -inf
    %435 = vmax.xlane.f32.xlu0 %v434
    %v436 = vpop.xlane.xlu0 %435
    %v437 = vsel %vm249, %v432, -inf
    %438 = vmax.xlane.f32.xlu0 %v437
    %v439 = vpop.xlane.xlu0 %438
    %v440 = vsel %vm249, %v433, -inf
    %441 = vmax.xlane.f32.xlu0 %v440
    %v442 = vpop.xlane.xlu0 %441
    %v443 = vsub.f32 %v431, %v436
    %v444 = vsub.f32 %v432, %v439
    %v445 = vsub.f32 %v433, %v442
    %v446 = vmul.f32 %v443, 1.442695
    %v447 = vpow.pop %v446
    %v448 = vmul.f32 %v444, 1.442695
    %v449 = vpow.pop %v448
    %v450 = vmul.f32 %v445, 1.442695
    %v451 = vpow.pop %v450
    %v452 = vsel %vm249, %v447, 0.0
    %453 = vadd.xlane.f32.xlu0 %v452
    %v454 = vpop.xlane.xlu0 %453
    %v455 = vsel %vm249, %v449, 0.0
    %456 = vadd.xlane.f32.xlu0 %v455
    %v457 = vpop.xlane.xlu0 %456
    %v458 = vsel %vm249, %v451, 0.0
    %459 = vadd.xlane.f32.xlu0 %v458
    %v460 = vpop.xlane.xlu0 %459
    %v461 = vrcp.pop %v454
    %v462 = vmul.f32 %v454, %v461
    %v463 = vsub.f32 1.0, %v462
    %v464 = vmul.f32 %v461, %v463
    %v465 = vadd.f32 %v461, %v464
    %vm466 = vweird.f32 %v454
    %vm467 = vweird.f32 %v461
    %vm468 = vmor %vm466, %vm467
    %v469 = vsel %vm468, %v461, %v465
    %v470 = vand.u32 2147483647, %v454
    %vm471 = vcmp.eq.f32.partialorder %v470, 8.507059e+37
    %v472 = vand.u32 %v454, 2147483648
    %v473 = vor.u32 1.1754944e-38, %v472
    %v474 = vsel %vm471, %v473, %v469
    %v475 = vmul.f32 %v447, %v474
    %v476 = vrcp.pop %v457
    %v477 = vmul.f32 %v457, %v476
    %v478 = vsub.f32 1.0, %v477
    %v479 = vmul.f32 %v476, %v478
    %v480 = vadd.f32 %v476, %v479
    %vm481 = vweird.f32 %v457
    %vm482 = vweird.f32 %v476
    %vm483 = vmor %vm481, %vm482
    %v484 = vsel %vm483, %v476, %v480
    %v485 = vand.u32 2147483647, %v457
    %vm486 = vcmp.eq.f32.partialorder %v485, 8.507059e+37
    %v487 = vand.u32 %v457, 2147483648
    %v488 = vor.u32 1.1754944e-38, %v487
    %v489 = vsel %vm486, %v488, %v484
    %v490 = vmul.f32 %v449, %v489
    %v491 = vrcp.pop %v460
    %v492 = vmul.f32 %v460, %v491
    %v493 = vsub.f32 1.0, %v492
    %v494 = vmul.f32 %v491, %v493
    %v495 = vadd.f32 %v491, %v494
    %vm496 = vweird.f32 %v460
    %vm497 = vweird.f32 %v491
    %vm498 = vmor %vm496, %vm497
    %v499 = vsel %vm498, %v491, %v495
    %v500 = vand.u32 2147483647, %v460
    %vm501 = vcmp.eq.f32.partialorder %v500, 8.507059e+37
    %v502 = vand.u32 %v460, 2147483648
    %v503 = vor.u32 1.1754944e-38, %v502
    %v504 = vsel %vm501, %v503, %v499
    %v505 = vmul.f32 %v451, %v504
    %v506 = vpack.c.bf16 %v490, %v475
    %v507 = vpack.c.bf16 %v505, %v505
    %508 = vrot.lane.b32.xlu0 %v170, 56
    %v509 = vpop.permute.xlu0 %508
    %510 = vrot.lane.b32.xlu0 %v171, 56
    %v511 = vpop.permute.xlu0 %510
    %v514 = vsel %vm249, %v506, 0
    %v517 = vsel %vm249, %v507, 0
    %v520 = vsel %vm224, %v511, 0
    %522 = vmatpush.bf16.msra.mxu0 0
    %523 = vmatpush.bf16.msra.mxu0 0
    %524 = vmatpush.bf16.msra.mxu0 0
    %525 = vmatpush.bf16.msra.mxu0 0
    %526 = vmatpush.bf16.msra.mxu0 0
    %527 = vmatpush.bf16.msra.mxu0 0
    %528 = vmatpush.bf16.msra.mxu0 %v520
    %529 = vmatpush.bf16.msra.mxu0 %v509
    %530 = vmatmul.bf16.gmra.mxu0 %v514
    %v531 = vpop.f32.mrf.mxu0
    %v532 = vadd.f32 0.0, %v531
    %v533 = vpop.f32.mrf.mxu0
    %v534 = vadd.f32 0.0, %v533
    %535 = vmatmul.bf16.gmra.mxu0 %v517
    %v536 = vpop.f32.mrf.mxu0
    %v537 = vadd.f32 0.0, %v536
    %v538 = vpop.f32.mrf.mxu0
    %539 = vdwg.mxu0
    %540 = vrot.lane.b32.xlu0 %v162, 80
    %v541 = vpop.permute.xlu0 %540
    %542 = vrot.lane.b32.xlu0 %v164, 80
    %v543 = vpop.permute.xlu0 %542
    %544 = vrot.lane.b32.xlu0 %v167, 80
    %v545 = vpop.permute.xlu0 %544
    %549 = vxpose.xlu0.b32.start [1/16] %v541, 128
    %550 = vxpose.xlu0.b32.cont [2/16] %v543, 128
    %551 = vxpose.xlu0.b32.cont [3/16] %v545, 128
    %552 = vxpose.xlu0.b32.cont [4/16] 0.0, 128
    %553 = vxpose.xlu0.b32.cont [5/16] 0.0, 128
    %554 = vxpose.xlu0.b32.cont [6/16] 0.0, 128
    %555 = vxpose.xlu0.b32.cont [7/16] 0.0, 128
    %556 = vxpose.xlu0.b32.cont [8/16] 0.0, 128
    %557 = vxpose.xlu0.b32.cont [9/16] 0.0, 128
    %558 = vxpose.xlu0.b32.cont [10/16] 0.0, 128
    %559 = vxpose.xlu0.b32.cont [11/16] 0.0, 128
    %560 = vxpose.xlu0.b32.cont [12/16] 0.0, 128
    %561 = vxpose.xlu0.b32.cont [13/16] 0.0, 128
    %562 = vxpose.xlu0.b32.cont [14/16] 0.0, 128
    %563 = vxpose.xlu0.b32.cont [15/16] 0.0, 128
    %564 = vxpose.xlu0.b32.end [16/16] 0.0, 128
    %v565 = vpop.trf.xlu0
    %v566 = vpop.trf.xlu0
    %v567 = vpop.trf.xlu0
    %v568 = vpop.trf.xlu0
    %v569 = vpop.trf.xlu0
    %v570 = vpop.trf.xlu0
    %v571 = vpop.trf.xlu0
    %v572 = vpop.trf.xlu0
    %v573 = vpop.trf.xlu0
    %v574 = vpop.trf.xlu0
    %v575 = vpop.trf.xlu0
    %v576 = vpop.trf.xlu0
    %v577 = vpop.trf.xlu0
    %v578 = vpop.trf.xlu0
    %v579 = vpop.trf.xlu0
    %v580 = vpop.trf.xlu0
    %v581 = vpack.c.bf16 %v565, %v565
    %582 = vrot.lane.b32.xlu0 %v170, 112
    %v583 = vpop.permute.xlu0 %582
    %584 = vrot.lane.b32.xlu0 %v171, 112
    %v585 = vpop.permute.xlu0 %584
    %v587 = vsel %vm217, %v583, 0
    %v590 = vsel %vm217, %v585, 0
    %v593 = vsel %vm224, %v581, 0
    %595 = vmatpush.bf16.msra.mxu0 0
    %596 = vmatpush.bf16.msra.mxu0 0
    %597 = vmatpush.bf16.msra.mxu0 0
    %598 = vmatpush.bf16.msra.mxu0 0
    %599 = vmatpush.bf16.msra.mxu0 0
    %600 = vmatpush.bf16.msra.mxu0 0
    %601 = vmatpush.bf16.msra.mxu0 0
    %602 = vmatpush.bf16.msra.mxu0 %v593
    %603 = vmatmul.bf16.gmra.mxu0 %v587
    %v604 = vpop.f32.mrf.mxu0
    %v605 = vadd.f32 0.0, %v604
    %v606 = vpop.f32.mrf.mxu0
    %v607 = vadd.f32 0.0, %v606
    %608 = vmatmul.bf16.gmra.mxu0 %v590
    %v609 = vpop.f32.mrf.mxu0
    %v610 = vadd.f32 0.0, %v609
    %v611 = vpop.f32.mrf.mxu0
    %612 = vdwg.mxu0
    %v613 = vsel %vm99, %v605, -1e+30
    %v614 = vsel %vm100, %v607, -1e+30
    %v615 = vsel %vm101, %v610, -1e+30
    %v616 = vsel %vm249, %v613, -inf
    %617 = vmax.xlane.f32.xlu0 %v616
    %v618 = vpop.xlane.xlu0 %617
    %v619 = vsel %vm249, %v614, -inf
    %620 = vmax.xlane.f32.xlu0 %v619
    %v621 = vpop.xlane.xlu0 %620
    %v622 = vsel %vm249, %v615, -inf
    %623 = vmax.xlane.f32.xlu0 %v622
    %v624 = vpop.xlane.xlu0 %623
    %v625 = vsub.f32 %v613, %v618
    %v626 = vsub.f32 %v614, %v621
    %v627 = vsub.f32 %v615, %v624
    %v628 = vmul.f32 %v625, 1.442695
    %v629 = vpow.pop %v628
    %v630 = vmul.f32 %v626, 1.442695
    %v631 = vpow.pop %v630
    %v632 = vmul.f32 %v627, 1.442695
    %v633 = vpow.pop %v632
    %v634 = vsel %vm249, %v629, 0.0
    %635 = vadd.xlane.f32.xlu0 %v634
    %v636 = vpop.xlane.xlu0 %635
    %v637 = vsel %vm249, %v631, 0.0
    %638 = vadd.xlane.f32.xlu0 %v637
    %v639 = vpop.xlane.xlu0 %638
    %v640 = vsel %vm249, %v633, 0.0
    %641 = vadd.xlane.f32.xlu0 %v640
    %v642 = vpop.xlane.xlu0 %641
    %v643 = vrcp.pop %v636
    %v644 = vmul.f32 %v636, %v643
    %v645 = vsub.f32 1.0, %v644
    %v646 = vmul.f32 %v643, %v645
    %v647 = vadd.f32 %v643, %v646
    %vm648 = vweird.f32 %v636
    %vm649 = vweird.f32 %v643
    %vm650 = vmor %vm648, %vm649
    %v651 = vsel %vm650, %v643, %v647
    %v652 = vand.u32 2147483647, %v636
    %vm653 = vcmp.eq.f32.partialorder %v652, 8.507059e+37
    %v654 = vand.u32 %v636, 2147483648
    %v655 = vor.u32 1.1754944e-38, %v654
    %v656 = vsel %vm653, %v655, %v651
    %v657 = vmul.f32 %v629, %v656
    %v658 = vrcp.pop %v639
    %v659 = vmul.f32 %v639, %v658
    %v660 = vsub.f32 1.0, %v659
    %v661 = vmul.f32 %v658, %v660
    %v662 = vadd.f32 %v658, %v661
    %vm663 = vweird.f32 %v639
    %vm664 = vweird.f32 %v658
    %vm665 = vmor %vm663, %vm664
    %v666 = vsel %vm665, %v658, %v662
    %v667 = vand.u32 2147483647, %v639
    %vm668 = vcmp.eq.f32.partialorder %v667, 8.507059e+37
    %v669 = vand.u32 %v639, 2147483648
    %v670 = vor.u32 1.1754944e-38, %v669
    %v671 = vsel %vm668, %v670, %v666
    %v672 = vmul.f32 %v631, %v671
    %v673 = vrcp.pop %v642
    %v674 = vmul.f32 %v642, %v673
    %v675 = vsub.f32 1.0, %v674
    %v676 = vmul.f32 %v673, %v675
    %v677 = vadd.f32 %v673, %v676
    %vm678 = vweird.f32 %v642
    %vm679 = vweird.f32 %v673
    %vm680 = vmor %vm678, %vm679
    %v681 = vsel %vm680, %v673, %v677
    %v682 = vand.u32 2147483647, %v642
    %vm683 = vcmp.eq.f32.partialorder %v682, 8.507059e+37
    %v684 = vand.u32 %v642, 2147483648
    %v685 = vor.u32 1.1754944e-38, %v684
    %v686 = vsel %vm683, %v685, %v681
    %v687 = vmul.f32 %v633, %v686
    %v688 = vpack.c.bf16 %v672, %v657
    %v689 = vpack.c.bf16 %v687, %v687
    %690 = vrot.lane.b32.xlu0 %v170, 48
    %v691 = vpop.permute.xlu0 %690
    %692 = vrot.lane.b32.xlu0 %v171, 48
    %v693 = vpop.permute.xlu0 %692
    %v696 = vsel %vm249, %v688, 0
    %v699 = vsel %vm249, %v689, 0
    %v702 = vsel %vm224, %v693, 0
    %704 = vmatpush.bf16.msra.mxu0 0
    %705 = vmatpush.bf16.msra.mxu0 0
    %706 = vmatpush.bf16.msra.mxu0 0
    %707 = vmatpush.bf16.msra.mxu0 0
    %708 = vmatpush.bf16.msra.mxu0 0
    %709 = vmatpush.bf16.msra.mxu0 0
    %710 = vmatpush.bf16.msra.mxu0 %v702
    %711 = vmatpush.bf16.msra.mxu0 %v691
    %712 = vmatmul.bf16.gmra.mxu0 %v696
    %v713 = vpop.f32.mrf.mxu0
    %v714 = vadd.f32 0.0, %v713
    %v715 = vpop.f32.mrf.mxu0
    %v716 = vadd.f32 0.0, %v715
    %717 = vmatmul.bf16.gmra.mxu0 %v699
    %v718 = vpop.f32.mrf.mxu0
    %v719 = vadd.f32 0.0, %v718
    %v720 = vpop.f32.mrf.mxu0
    %721 = vdwg.mxu0
    %722 = vrot.lane.b32.xlu0 %v162, 72
    %v723 = vpop.permute.xlu0 %722
    %724 = vrot.lane.b32.xlu0 %v164, 72
    %v725 = vpop.permute.xlu0 %724
    %726 = vrot.lane.b32.xlu0 %v167, 72
    %v727 = vpop.permute.xlu0 %726
    %731 = vxpose.xlu0.b32.start [1/16] %v723, 128
    %732 = vxpose.xlu0.b32.cont [2/16] %v725, 128
    %733 = vxpose.xlu0.b32.cont [3/16] %v727, 128
    %734 = vxpose.xlu0.b32.cont [4/16] 0.0, 128
    %735 = vxpose.xlu0.b32.cont [5/16] 0.0, 128
    %736 = vxpose.xlu0.b32.cont [6/16] 0.0, 128
    %737 = vxpose.xlu0.b32.cont [7/16] 0.0, 128
    %738 = vxpose.xlu0.b32.cont [8/16] 0.0, 128
    %739 = vxpose.xlu0.b32.cont [9/16] 0.0, 128
    %740 = vxpose.xlu0.b32.cont [10/16] 0.0, 128
    %741 = vxpose.xlu0.b32.cont [11/16] 0.0, 128
    %742 = vxpose.xlu0.b32.cont [12/16] 0.0, 128
    %743 = vxpose.xlu0.b32.cont [13/16] 0.0, 128
    %744 = vxpose.xlu0.b32.cont [14/16] 0.0, 128
    %745 = vxpose.xlu0.b32.cont [15/16] 0.0, 128
    %746 = vxpose.xlu0.b32.end [16/16] 0.0, 128
    %v747 = vpop.trf.xlu0
    %v748 = vpop.trf.xlu0
    %v749 = vpop.trf.xlu0
    %v750 = vpop.trf.xlu0
    %v751 = vpop.trf.xlu0
    %v752 = vpop.trf.xlu0
    %v753 = vpop.trf.xlu0
    %v754 = vpop.trf.xlu0
    %v755 = vpop.trf.xlu0
    %v756 = vpop.trf.xlu0
    %v757 = vpop.trf.xlu0
    %v758 = vpop.trf.xlu0
    %v759 = vpop.trf.xlu0
    %v760 = vpop.trf.xlu0
    %v761 = vpop.trf.xlu0
    %v762 = vpop.trf.xlu0
    %v763 = vpack.c.bf16 %v747, %v747
    %764 = vrot.lane.b32.xlu0 %v170, 104
    %v765 = vpop.permute.xlu0 %764
    %766 = vrot.lane.b32.xlu0 %v171, 104
    %v767 = vpop.permute.xlu0 %766
    %v769 = vsel %vm217, %v765, 0
    %v772 = vsel %vm217, %v767, 0
    %v775 = vsel %vm224, %v763, 0
    %777 = vmatpush.bf16.msra.mxu0 0
    %778 = vmatpush.bf16.msra.mxu0 0
    %779 = vmatpush.bf16.msra.mxu0 0
    %780 = vmatpush.bf16.msra.mxu0 0
    %781 = vmatpush.bf16.msra.mxu0 0
    %782 = vmatpush.bf16.msra.mxu0 0
    %783 = vmatpush.bf16.msra.mxu0 0
    %784 = vmatpush.bf16.msra.mxu0 %v775
    %785 = vmatmul.bf16.gmra.mxu0 %v769
    %v786 = vpop.f32.mrf.mxu0
    %v787 = vadd.f32 0.0, %v786
    %v788 = vpop.f32.mrf.mxu0
    %v789 = vadd.f32 0.0, %v788
    %790 = vmatmul.bf16.gmra.mxu0 %v772
    %v791 = vpop.f32.mrf.mxu0
    %v792 = vadd.f32 0.0, %v791
    %v793 = vpop.f32.mrf.mxu0
    %794 = vdwg.mxu0
    %v795 = vsel %vm99, %v787, -1e+30
    %v796 = vsel %vm100, %v789, -1e+30
    %v797 = vsel %vm101, %v792, -1e+30
    %v798 = vsel %vm249, %v795, -inf
    %799 = vmax.xlane.f32.xlu0 %v798
    %v800 = vpop.xlane.xlu0 %799
    %v801 = vsel %vm249, %v796, -inf
    %802 = vmax.xlane.f32.xlu0 %v801
    %v803 = vpop.xlane.xlu0 %802
    %v804 = vsel %vm249, %v797, -inf
    %805 = vmax.xlane.f32.xlu0 %v804
    %v806 = vpop.xlane.xlu0 %805
    %v807 = vsub.f32 %v795, %v800
    %v808 = vsub.f32 %v796, %v803
    %v809 = vsub.f32 %v797, %v806
    %v810 = vmul.f32 %v807, 1.442695
    %v811 = vpow.pop %v810
    %v812 = vmul.f32 %v808, 1.442695
    %v813 = vpow.pop %v812
    %v814 = vmul.f32 %v809, 1.442695
    %v815 = vpow.pop %v814
    %v816 = vsel %vm249, %v811, 0.0
    %817 = vadd.xlane.f32.xlu0 %v816
    %v818 = vpop.xlane.xlu0 %817
    %v819 = vsel %vm249, %v813, 0.0
    %820 = vadd.xlane.f32.xlu0 %v819
    %v821 = vpop.xlane.xlu0 %820
    %v822 = vsel %vm249, %v815, 0.0
    %823 = vadd.xlane.f32.xlu0 %v822
    %v824 = vpop.xlane.xlu0 %823
    %v825 = vrcp.pop %v818
    %v826 = vmul.f32 %v818, %v825
    %v827 = vsub.f32 1.0, %v826
    %v828 = vmul.f32 %v825, %v827
    %v829 = vadd.f32 %v825, %v828
    %vm830 = vweird.f32 %v818
    %vm831 = vweird.f32 %v825
    %vm832 = vmor %vm830, %vm831
    %v833 = vsel %vm832, %v825, %v829
    %v834 = vand.u32 2147483647, %v818
    %vm835 = vcmp.eq.f32.partialorder %v834, 8.507059e+37
    %v836 = vand.u32 %v818, 2147483648
    %v837 = vor.u32 1.1754944e-38, %v836
    %v838 = vsel %vm835, %v837, %v833
    %v839 = vmul.f32 %v811, %v838
    %v840 = vrcp.pop %v821
    %v841 = vmul.f32 %v821, %v840
    %v842 = vsub.f32 1.0, %v841
    %v843 = vmul.f32 %v840, %v842
    %v844 = vadd.f32 %v840, %v843
    %vm845 = vweird.f32 %v821
    %vm846 = vweird.f32 %v840
    %vm847 = vmor %vm845, %vm846
    %v848 = vsel %vm847, %v840, %v844
    %v849 = vand.u32 2147483647, %v821
    %vm850 = vcmp.eq.f32.partialorder %v849, 8.507059e+37
    %v851 = vand.u32 %v821, 2147483648
    %v852 = vor.u32 1.1754944e-38, %v851
    %v853 = vsel %vm850, %v852, %v848
    %v854 = vmul.f32 %v813, %v853
    %v855 = vrcp.pop %v824
    %v856 = vmul.f32 %v824, %v855
    %v857 = vsub.f32 1.0, %v856
    %v858 = vmul.f32 %v855, %v857
    %v859 = vadd.f32 %v855, %v858
    %vm860 = vweird.f32 %v824
    %vm861 = vweird.f32 %v855
    %vm862 = vmor %vm860, %vm861
    %v863 = vsel %vm862, %v855, %v859
    %v864 = vand.u32 2147483647, %v824
    %vm865 = vcmp.eq.f32.partialorder %v864, 8.507059e+37
    %v866 = vand.u32 %v824, 2147483648
    %v867 = vor.u32 1.1754944e-38, %v866
    %v868 = vsel %vm865, %v867, %v863
    %v869 = vmul.f32 %v815, %v868
    %v870 = vpack.c.bf16 %v854, %v839
    %v871 = vpack.c.bf16 %v869, %v869
    %872 = vrot.lane.b32.xlu0 %v170, 40
    %v873 = vpop.permute.xlu0 %872
    %874 = vrot.lane.b32.xlu0 %v171, 40
    %v875 = vpop.permute.xlu0 %874
    %v878 = vsel %vm249, %v870, 0
    %v881 = vsel %vm249, %v871, 0
    %v884 = vsel %vm224, %v875, 0
    %886 = vmatpush.bf16.msra.mxu0 0
    %887 = vmatpush.bf16.msra.mxu0 0
    %888 = vmatpush.bf16.msra.mxu0 0
    %889 = vmatpush.bf16.msra.mxu0 0
    %890 = vmatpush.bf16.msra.mxu0 0
    %891 = vmatpush.bf16.msra.mxu0 0
    %892 = vmatpush.bf16.msra.mxu0 %v884
    %893 = vmatpush.bf16.msra.mxu0 %v873
    %894 = vmatmul.bf16.gmra.mxu0 %v878
    %v895 = vpop.f32.mrf.mxu0
    %v896 = vadd.f32 0.0, %v895
    %v897 = vpop.f32.mrf.mxu0
    %v898 = vadd.f32 0.0, %v897
    %899 = vmatmul.bf16.gmra.mxu0 %v881
    %v900 = vpop.f32.mrf.mxu0
    %v901 = vadd.f32 0.0, %v900
    %v902 = vpop.f32.mrf.mxu0
    %903 = vdwg.mxu0
    %907 = vrot.lane.b32.xlu0 %v532, 8
    %v908 = vpop.permute.xlu0 %907
    %909 = vrot.lane.b32.xlu0 %v534, 8
    %v910 = vpop.permute.xlu0 %909
    %911 = vrot.lane.b32.xlu0 %v537, 8
    %v912 = vpop.permute.xlu0 %911
    %919 = vrot.lane.b32.xlu0 %v714, 16
    %v920 = vpop.permute.xlu0 %919
    %921 = vrot.lane.b32.xlu0 %v716, 16
    %v922 = vpop.permute.xlu0 %921
    %923 = vrot.lane.b32.xlu0 %v719, 16
    %v924 = vpop.permute.xlu0 %923
    %931 = vrot.lane.b32.xlu0 %v896, 24
    %v932 = vpop.permute.xlu0 %931
    %933 = vrot.lane.b32.xlu0 %v898, 24
    %v934 = vpop.permute.xlu0 %933
    %935 = vrot.lane.b32.xlu0 %v901, 24
    %v936 = vpop.permute.xlu0 %935
    %v940 = vsel %vm217, %v350, %v908
    %v941 = vsel %vm217, %v352, %v910
    %v942 = vsel %vm217, %v355, %v912
    %vm943 = vcmask 130048
    %v944 = vsel %vm943, %v940, %v920
    %v945 = vsel %vm943, %v941, %v922
    %v946 = vsel %vm943, %v942, %v924
    %v947 = vsel %vm249, %v944, %v932
    %v948 = vsel %vm249, %v945, %v934
    %v949 = vsel %vm249, %v946, %v936
    %v950 = vpack.c.bf16 %v948, %v947
    %v951 = vpack.c.bf16 %v949, %v949
    %v952 = vperm.slane %v123, 0
    %v957 = vunpack.c.l.b16 %v106
    %v958 = vunpack.c.l.b16 %v107
    %v959 = vunpack.c.l.b16 %v108
    %v960 = vunpack.c.l.b16 %v109
    %v961 = vpack.c.b16 %v958, %v957
    %v962 = vpack.c.b16 %v960, %v959
    %v966 = vsel %vm145, %v950, 0
    %v969 = vsel %vm145, %v951, 0
    %971 = vmatpush.bf16.msra.mxu0 0
    %972 = vmatpush.bf16.msra.mxu0 0
    %973 = vmatpush.bf16.msra.mxu0 0
    %974 = vmatpush.bf16.msra.mxu0 0
    %975 = vmatpush.bf16.msra.mxu0 0
    %976 = vmatpush.bf16.msra.mxu0 0
    %977 = vmatpush.bf16.msra.mxu0 %v962
    %978 = vmatpush.bf16.msra.mxu0 %v961
    %979 = vmatmul.bf16.gmra.mxu0 %v966
    %v980 = vpop.f32.mrf.mxu0
    %v981 = vadd.f32 %v952, %v980
    %v982 = vpop.f32.mrf.mxu0
    %v983 = vadd.f32 %v952, %v982
    %984 = vmatmul.bf16.gmra.mxu0 %v969
    %v985 = vpop.f32.mrf.mxu0
    %v986 = vadd.f32 %v952, %v985
    %v987 = vpop.f32.mrf.mxu0
    %988 = vdwg.mxu0
    %v989 = vadd.f32 %v78, %v981
    %v990 = vadd.f32 %v80, %v983
    %v991 = vadd.f32 %v83, %v986
    %v992 = vsel %vm145, %v989, 0.0
    %993 = vadd.xlane.f32.xlu0 %v992
    %v994 = vpop.xlane.xlu0 %993
    %v995 = vsel %vm145, %v990, 0.0
    %996 = vadd.xlane.f32.xlu0 %v995
    %v997 = vpop.xlane.xlu0 %996
    %v998 = vsel %vm145, %v991, 0.0
    %999 = vadd.xlane.f32.xlu0 %v998
    %v1000 = vpop.xlane.xlu0 %999
    %v1001 = vrcp.pop 32.0
    %v1002 = vmul.f32 32.0, %v1001
    %v1003 = vsub.f32 1.0, %v1002
    %v1004 = vmul.f32 %v1001, %v1003
    %v1005 = vadd.f32 %v1001, %v1004
    %vm1006 = vweird.f32 %v1001
    %v1007 = vsel %vm1006, %v1001, %v1005
    %v1008 = vmul.f32 %v994, %v1007
    %v1009 = vmul.f32 %v997, %v1007
    %v1010 = vmul.f32 %v1000, %v1007
    %v1011 = vsub.f32 %v989, %v1008
    %v1012 = vsub.f32 %v990, %v1009
    %v1013 = vsub.f32 %v991, %v1010
    %v1014 = vmul.f32 %v1011, %v1011
    %v1015 = vmul.f32 %v1012, %v1012
    %v1016 = vmul.f32 %v1013, %v1013
    %v1017 = vsel %vm145, %v1014, 0.0
    %1018 = vadd.xlane.f32.xlu0 %v1017
    %v1019 = vpop.xlane.xlu0 %1018
    %v1020 = vsel %vm145, %v1015, 0.0
    %1021 = vadd.xlane.f32.xlu0 %v1020
    %v1022 = vpop.xlane.xlu0 %1021
    %v1023 = vsel %vm145, %v1016, 0.0
    %1024 = vadd.xlane.f32.xlu0 %v1023
    %v1025 = vpop.xlane.xlu0 %1024
    %v1026 = vmul.f32 %v1019, %v1007
    %v1027 = vmul.f32 %v1022, %v1007
    %v1028 = vmul.f32 %v1025, %v1007
    %v1029 = vadd.f32 %v1026, 1e-05
    %v1030 = vadd.f32 %v1027, 1e-05
    %v1031 = vadd.f32 %v1028, 1e-05
    %v1032 = vrsqrt.pop %v1029
    %v1033 = vmul.f32 %v1032, %v1029
    %v1034 = vmul.f32 %v1033, %v1032
    %v1035 = vmul.f32 0.5, %v1034
    %v1036 = vsub.f32 1.5, %v1035
    %v1037 = vmul.f32 %v1032, %v1036
    %vm1038 = vweird.f32 %v1029
    %vm1039 = vweird.f32 %v1032
    %vm1040 = vmor %vm1038, %vm1039
    %v1041 = vsel %vm1040, %v1032, %v1037
    %v1042 = vrsqrt.pop %v1030
    %v1043 = vmul.f32 %v1042, %v1030
    %v1044 = vmul.f32 %v1043, %v1042
    %v1045 = vmul.f32 0.5, %v1044
    %v1046 = vsub.f32 1.5, %v1045
    %v1047 = vmul.f32 %v1042, %v1046
    %vm1048 = vweird.f32 %v1030
    %vm1049 = vweird.f32 %v1042
    %vm1050 = vmor %vm1048, %vm1049
    %v1051 = vsel %vm1050, %v1042, %v1047
    %v1052 = vrsqrt.pop %v1031
    %v1053 = vmul.f32 %v1052, %v1031
    %v1054 = vmul.f32 %v1053, %v1052
    %v1055 = vmul.f32 0.5, %v1054
    %v1056 = vsub.f32 1.5, %v1055
    %v1057 = vmul.f32 %v1052, %v1056
    %vm1058 = vweird.f32 %v1031
    %vm1059 = vweird.f32 %v1052
    %vm1060 = vmor %vm1058, %vm1059
    %v1061 = vsel %vm1060, %v1052, %v1057
    %v1062 = vmul.f32 %v1011, %v1041
    %v1063 = vmul.f32 %v1012, %v1051
    %v1064 = vmul.f32 %v1013, %v1061
    %v1065 = vperm.slane %v124, 0
    %v1066 = vmul.f32 %v1062, %v1065
    %v1067 = vmul.f32 %v1063, %v1065
    %v1068 = vmul.f32 %v1064, %v1065
    %v1069 = vperm.slane %v125, 0
    %v1070 = vadd.f32 %v1066, %v1069
    %v1071 = vadd.f32 %v1067, %v1069
    %v1072 = vadd.f32 %v1068, %v1069
    %v1073 = vpack.c.bf16 %v1071, %v1070
    %v1074 = vpack.c.bf16 %v1072, %v1072
    %v1075 = vperm.slane %v126, 0
    %v1080 = vunpack.c.l.b16 %v110
    %v1081 = vunpack.c.l.b16 %v111
    %v1082 = vunpack.c.l.b16 %v112
    %v1083 = vunpack.c.l.b16 %v113
    %v1084 = vpack.c.b16 %v1081, %v1080
    %v1085 = vpack.c.b16 %v1083, %v1082
    %v1089 = vsel %vm145, %v1073, 0
    %v1092 = vsel %vm145, %v1074, 0
    %1094 = vmatpush.bf16.msra.mxu0 0
    %1095 = vmatpush.bf16.msra.mxu0 0
    %1096 = vmatpush.bf16.msra.mxu0 0
    %1097 = vmatpush.bf16.msra.mxu0 0
    %1098 = vmatpush.bf16.msra.mxu0 0
    %1099 = vmatpush.bf16.msra.mxu0 0
    %1100 = vmatpush.bf16.msra.mxu0 %v1085
    %1101 = vmatpush.bf16.msra.mxu0 %v1084
    %1102 = vmatmul.bf16.gmra.mxu0 %v1089
    %v1103 = vpop.f32.mrf.mxu0
    %v1104 = vadd.f32 %v1075, %v1103
    %v1105 = vpop.f32.mrf.mxu0
    %v1106 = vadd.f32 %v1075, %v1105
    %1107 = vmatmul.bf16.gmra.mxu0 %v1092
    %v1108 = vpop.f32.mrf.mxu0
    %v1109 = vadd.f32 %v1075, %v1108
    %v1110 = vpop.f32.mrf.mxu0
    %1111 = vdwg.mxu0
    %v1112 = vmax.f32 %v1104, 0.0
    %v1113 = vmax.f32 %v1106, 0.0
    %v1114 = vmax.f32 %v1109, 0.0
    %v1115 = vpack.c.bf16 %v1113, %v1112
    %v1116 = vpack.c.bf16 %v1114, %v1114
    %v1117 = vperm.slane %v127, 0
    %v1126 = vunpack.c.l.b16 %v114
    %v1127 = vunpack.c.l.b16 %v115
    %v1128 = vunpack.c.l.b16 %v116
    %v1129 = vunpack.c.l.b16 %v117
    %v1130 = vunpack.c.l.b16 %v118
    %v1131 = vunpack.c.l.b16 %v119
    %v1132 = vunpack.c.l.b16 %v120
    %v1133 = vunpack.c.l.b16 %v121
    %v1134 = vpack.c.b16 %v1127, %v1126
    %v1135 = vpack.c.b16 %v1129, %v1128
    %v1136 = vpack.c.b16 %v1131, %v1130
    %v1137 = vpack.c.b16 %v1133, %v1132
    %vm1142 = vcmask 523264
    %v1144 = vsel %vm1142, %v1115, 0
    %v1147 = vsel %vm1142, %v1116, 0
    %1149 = vmatpush.bf16.msra.mxu0 0
    %1150 = vmatpush.bf16.msra.mxu0 0
    %1151 = vmatpush.bf16.msra.mxu0 0
    %1152 = vmatpush.bf16.msra.mxu0 0
    %1153 = vmatpush.bf16.msra.mxu0 %v1137
    %1154 = vmatpush.bf16.msra.mxu0 %v1136
    %1155 = vmatpush.bf16.msra.mxu0 %v1135
    %1156 = vmatpush.bf16.msra.mxu0 %v1134
    %1157 = vmatmul.bf16.gmra.mxu0 %v1144
    %v1158 = vpop.f32.mrf.mxu0
    %v1159 = vadd.f32 %v1117, %v1158
    %v1160 = vpop.f32.mrf.mxu0
    %v1161 = vadd.f32 %v1117, %v1160
    %1162 = vmatmul.bf16.gmra.mxu0 %v1147
    %v1163 = vpop.f32.mrf.mxu0
    %v1164 = vadd.f32 %v1117, %v1163
    %v1165 = vpop.f32.mrf.mxu0
    %1166 = vdwg.mxu0
    %v1167 = vadd.f32 %v1070, %v1159
    %v1168 = vadd.f32 %v1071, %v1161
    %v1169 = vadd.f32 %v1072, %v1164
    %v1170 = vsel %vm145, %v1167, 0.0
    %1171 = vadd.xlane.f32.xlu0 %v1170
    %v1172 = vpop.xlane.xlu0 %1171
    %v1173 = vsel %vm145, %v1168, 0.0
    %1174 = vadd.xlane.f32.xlu0 %v1173
    %v1175 = vpop.xlane.xlu0 %1174
    %v1176 = vsel %vm145, %v1169, 0.0
    %1177 = vadd.xlane.f32.xlu0 %v1176
    %v1178 = vpop.xlane.xlu0 %1177
    %v1179 = vmul.f32 %v1172, %v1007
    %v1180 = vmul.f32 %v1175, %v1007
    %v1181 = vmul.f32 %v1178, %v1007
    %v1182 = vsub.f32 %v1167, %v1179
    %v1183 = vsub.f32 %v1168, %v1180
    %v1184 = vsub.f32 %v1169, %v1181
    %v1185 = vmul.f32 %v1182, %v1182
    %v1186 = vmul.f32 %v1183, %v1183
    %v1187 = vmul.f32 %v1184, %v1184
    %v1188 = vsel %vm145, %v1185, 0.0
    %1189 = vadd.xlane.f32.xlu0 %v1188
    %v1190 = vpop.xlane.xlu0 %1189
    %v1191 = vsel %vm145, %v1186, 0.0
    %1192 = vadd.xlane.f32.xlu0 %v1191
    %v1193 = vpop.xlane.xlu0 %1192
    %v1194 = vsel %vm145, %v1187, 0.0
    %1195 = vadd.xlane.f32.xlu0 %v1194
    %v1196 = vpop.xlane.xlu0 %1195
    %v1197 = vmul.f32 %v1190, %v1007
    %v1198 = vmul.f32 %v1193, %v1007
    %v1199 = vmul.f32 %v1196, %v1007
    %v1200 = vadd.f32 %v1197, 1e-05
    %v1201 = vadd.f32 %v1198, 1e-05
    %v1202 = vadd.f32 %v1199, 1e-05
    %v1203 = vrsqrt.pop %v1200
    %v1204 = vmul.f32 %v1203, %v1200
    %v1205 = vmul.f32 %v1204, %v1203
    %v1206 = vmul.f32 0.5, %v1205
    %v1207 = vsub.f32 1.5, %v1206
    %v1208 = vmul.f32 %v1203, %v1207
    %vm1209 = vweird.f32 %v1200
    %vm1210 = vweird.f32 %v1203
    %vm1211 = vmor %vm1209, %vm1210
    %v1212 = vsel %vm1211, %v1203, %v1208
    %v1213 = vrsqrt.pop %v1201
    %v1214 = vmul.f32 %v1213, %v1201
    %v1215 = vmul.f32 %v1214, %v1213
    %v1216 = vmul.f32 0.5, %v1215
    %v1217 = vsub.f32 1.5, %v1216
    %v1218 = vmul.f32 %v1213, %v1217
    %vm1219 = vweird.f32 %v1201
    %vm1220 = vweird.f32 %v1213
    %vm1221 = vmor %vm1219, %vm1220
    %v1222 = vsel %vm1221, %v1213, %v1218
    %v1223 = vrsqrt.pop %v1202
    %v1224 = vmul.f32 %v1223, %v1202
    %v1225 = vmul.f32 %v1224, %v1223
    %v1226 = vmul.f32 0.5, %v1225
    %v1227 = vsub.f32 1.5, %v1226
    %v1228 = vmul.f32 %v1223, %v1227
    %vm1229 = vweird.f32 %v1202
    %vm1230 = vweird.f32 %v1223
    %vm1231 = vmor %vm1229, %vm1230
    %v1232 = vsel %vm1231, %v1223, %v1228
    %v1233 = vmul.f32 %v1182, %v1212
    %v1234 = vmul.f32 %v1183, %v1222
    %v1235 = vmul.f32 %v1184, %v1232
    %v1236 = vperm.slane %v128, 0
    %v1237 = vmul.f32 %v1233, %v1236
    %v1238 = vmul.f32 %v1234, %v1236
    %v1239 = vmul.f32 %v1235, %v1236
    %v1240 = vperm.slane %v129, 0
    %v1241 = vadd.f32 %v1237, %v1240
    %v1242 = vadd.f32 %v1238, %v1240
    %v1243 = vadd.f32 %v1239, %v1240
    %v1244 = vld [vmem:[#allocation2 + $0x58] sm:$0xf]
    %v1245 = vld [vmem:[#allocation2 + $0x5c] sm:$0xf]
    %v1246 = vld [vmem:[#allocation2 + $0x60] sm:$0xf]
    %v1247 = vld [vmem:[#allocation2 + $0x64] sm:$0xf]
    %v1248 = vld [vmem:[#allocation2 + $0x68] sm:$0xf]
    %v1249 = vld [vmem:[#allocation2 + $0x6c] sm:$0xf]
    %v1250 = vld [vmem:[#allocation2 + $0x70] sm:$0xf]
    %v1251 = vld [vmem:[#allocation2 + $0x74] sm:$0xf]
    %v1252 = vld [vmem:[#allocation2 + $0x78] sm:$0xf]
    %v1253 = vld [vmem:[#allocation2 + $0x7c] sm:$0xf]
    %v1254 = vld [vmem:[#allocation2 + $0x80] sm:$0xf]
    %v1255 = vld [vmem:[#allocation2 + $0x84] sm:$0xf]
    %v1256 = vld [vmem:[#allocation2 + $0x88] sm:$0xf]
    %v1257 = vld [vmem:[#allocation2 + $0x8c] sm:$0xf]
    %v1258 = vld [vmem:[#allocation2 + $0x90] sm:$0xf]
    %v1259 = vld [vmem:[#allocation2 + $0x94] sm:$0xf]
    %v1260 = vld [vmem:[#allocation2 + $0x98] sm:$0xf]
    %v1261 = vld [vmem:[#allocation2 + $0x9c] sm:$0xf]
    %v1262 = vld [vmem:[#allocation2 + $0xa0] sm:$0xf]
    %v1263 = vld [vmem:[#allocation2 + $0xa4] sm:$0xf]
    %v1264 = vld [vmem:[#allocation5 + $0x58] sm:$0x1]
    %v1265 = vld [vmem:[#allocation5 + $0x60] sm:$0x1]
    %v1266 = vld [vmem:[#allocation5 + $0x68] sm:$0x1]
    %v1267 = vld [vmem:[#allocation5 + $0x70] sm:$0x1]
    %v1268 = vld [vmem:[#allocation5 + $0x78] sm:$0x1]
    %v1269 = vld [vmem:[#allocation5 + $0x80] sm:$0x1]
    %v1270 = vld [vmem:[#allocation5 + $0x88] sm:$0x1]
    %v1271 = vld [vmem:[#allocation5 + $0x90] sm:$0x1]
    %v1272 = vpack.c.bf16 %v1242, %v1241
    %v1273 = vpack.c.bf16 %v1243, %v1243
    %v1274 = vperm.slane %v1264, 0
    %v1279 = vunpack.c.l.b16 %v1244
    %v1280 = vunpack.c.l.b16 %v1245
    %v1281 = vunpack.c.l.b16 %v1246
    %v1282 = vunpack.c.l.b16 %v1247
    %v1283 = vpack.c.b16 %v1280, %v1279
    %v1284 = vpack.c.b16 %v1282, %v1281
    %v1288 = vsel %vm145, %v1272, 0
    %v1291 = vsel %vm145, %v1273, 0
    %1293 = vmatpush.bf16.msra.mxu0 0
    %1294 = vmatpush.bf16.msra.mxu0 0
    %1295 = vmatpush.bf16.msra.mxu0 0
    %1296 = vmatpush.bf16.msra.mxu0 0
    %1297 = vmatpush.bf16.msra.mxu0 0
    %1298 = vmatpush.bf16.msra.mxu0 0
    %1299 = vmatpush.bf16.msra.mxu0 %v1284
    %1300 = vmatpush.bf16.msra.mxu0 %v1283
    %1301 = vmatmul.bf16.gmra.mxu0 %v1288
    %v1302 = vpop.f32.mrf.mxu0
    %v1303 = vadd.f32 %v1274, %v1302
    %v1304 = vpop.f32.mrf.mxu0
    %v1305 = vadd.f32 %v1274, %v1304
    %1306 = vmatmul.bf16.gmra.mxu0 %v1291
    %v1307 = vpop.f32.mrf.mxu0
    %v1308 = vadd.f32 %v1274, %v1307
    %v1309 = vpop.f32.mrf.mxu0
    %1310 = vdwg.mxu0
    %v1311 = vpack.c.bf16 %v1305, %v1303
    %v1312 = vpack.c.bf16 %v1308, %v1308
    %1316 = vrot.lane.b32.xlu0 %v1303, 96
    %v1317 = vpop.permute.xlu0 %1316
    %1318 = vrot.lane.b32.xlu0 %v1305, 96
    %v1319 = vpop.permute.xlu0 %1318
    %1320 = vrot.lane.b32.xlu0 %v1308, 96
    %v1321 = vpop.permute.xlu0 %1320
    %1325 = vxpose.xlu0.b32.start [1/16] %v1317, 128
    %1326 = vxpose.xlu0.b32.cont [2/16] %v1319, 128
    %1327 = vxpose.xlu0.b32.cont [3/16] %v1321, 128
    %1328 = vxpose.xlu0.b32.cont [4/16] 0.0, 128
    %1329 = vxpose.xlu0.b32.cont [5/16] 0.0, 128
    %1330 = vxpose.xlu0.b32.cont [6/16] 0.0, 128
    %1331 = vxpose.xlu0.b32.cont [7/16] 0.0, 128
    %1332 = vxpose.xlu0.b32.cont [8/16] 0.0, 128
    %1333 = vxpose.xlu0.b32.cont [9/16] 0.0, 128
    %1334 = vxpose.xlu0.b32.cont [10/16] 0.0, 128
    %1335 = vxpose.xlu0.b32.cont [11/16] 0.0, 128
    %1336 = vxpose.xlu0.b32.cont [12/16] 0.0, 128
    %1337 = vxpose.xlu0.b32.cont [13/16] 0.0, 128
    %1338 = vxpose.xlu0.b32.cont [14/16] 0.0, 128
    %1339 = vxpose.xlu0.b32.cont [15/16] 0.0, 128
    %1340 = vxpose.xlu0.b32.end [16/16] 0.0, 128
    %v1341 = vpop.trf.xlu0
    %v1342 = vpop.trf.xlu0
    %v1343 = vpop.trf.xlu0
    %v1344 = vpop.trf.xlu0
    %v1345 = vpop.trf.xlu0
    %v1346 = vpop.trf.xlu0
    %v1347 = vpop.trf.xlu0
    %v1348 = vpop.trf.xlu0
    %v1349 = vpop.trf.xlu0
    %v1350 = vpop.trf.xlu0
    %v1351 = vpop.trf.xlu0
    %v1352 = vpop.trf.xlu0
    %v1353 = vpop.trf.xlu0
    %v1354 = vpop.trf.xlu0
    %v1355 = vpop.trf.xlu0
    %v1356 = vpop.trf.xlu0
    %v1357 = vpack.c.bf16 %v1341, %v1341
    %v1359 = vsel %vm217, %v1311, 0
    %v1362 = vsel %vm217, %v1312, 0
    %v1365 = vsel %vm224, %v1357, 0
    %1367 = vmatpush.bf16.msra.mxu0 0
    %1368 = vmatpush.bf16.msra.mxu0 0
    %1369 = vmatpush.bf16.msra.mxu0 0
    %1370 = vmatpush.bf16.msra.mxu0 0
    %1371 = vmatpush.bf16.msra.mxu0 0
    %1372 = vmatpush.bf16.msra.mxu0 0
    %1373 = vmatpush.bf16.msra.mxu0 0
    %1374 = vmatpush.bf16.msra.mxu0 %v1365
    %1375 = vmatmul.bf16.gmra.mxu0 %v1359
    %v1376 = vpop.f32.mrf.mxu0
    %v1377 = vadd.f32 0.0, %v1376
    %v1378 = vpop.f32.mrf.mxu0
    %v1379 = vadd.f32 0.0, %v1378
    %1380 = vmatmul.bf16.gmra.mxu0 %v1362
    %v1381 = vpop.f32.mrf.mxu0
    %v1382 = vadd.f32 0.0, %v1381
    %v1383 = vpop.f32.mrf.mxu0
    %1384 = vdwg.mxu0
    %v1385 = vsel %vm99, %v1377, -1e+30
    %v1386 = vsel %vm100, %v1379, -1e+30
    %v1387 = vsel %vm101, %v1382, -1e+30
    %v1388 = vsel %vm249, %v1385, -inf
    %1389 = vmax.xlane.f32.xlu0 %v1388
    %v1390 = vpop.xlane.xlu0 %1389
    %v1391 = vsel %vm249, %v1386, -inf
    %1392 = vmax.xlane.f32.xlu0 %v1391
    %v1393 = vpop.xlane.xlu0 %1392
    %v1394 = vsel %vm249, %v1387, -inf
    %1395 = vmax.xlane.f32.xlu0 %v1394
    %v1396 = vpop.xlane.xlu0 %1395
    %v1397 = vsub.f32 %v1385, %v1390
    %v1398 = vsub.f32 %v1386, %v1393
    %v1399 = vsub.f32 %v1387, %v1396
    %v1400 = vmul.f32 %v1397, 1.442695
    %v1401 = vpow.pop %v1400
    %v1402 = vmul.f32 %v1398, 1.442695
    %v1403 = vpow.pop %v1402
    %v1404 = vmul.f32 %v1399, 1.442695
    %v1405 = vpow.pop %v1404
    %v1406 = vsel %vm249, %v1401, 0.0
    %1407 = vadd.xlane.f32.xlu0 %v1406
    %v1408 = vpop.xlane.xlu0 %1407
    %v1409 = vsel %vm249, %v1403, 0.0
    %1410 = vadd.xlane.f32.xlu0 %v1409
    %v1411 = vpop.xlane.xlu0 %1410
    %v1412 = vsel %vm249, %v1405, 0.0
    %1413 = vadd.xlane.f32.xlu0 %v1412
    %v1414 = vpop.xlane.xlu0 %1413
    %v1415 = vrcp.pop %v1408
    %v1416 = vmul.f32 %v1408, %v1415
    %v1417 = vsub.f32 1.0, %v1416
    %v1418 = vmul.f32 %v1415, %v1417
    %v1419 = vadd.f32 %v1415, %v1418
    %vm1420 = vweird.f32 %v1408
    %vm1421 = vweird.f32 %v1415
    %vm1422 = vmor %vm1420, %vm1421
    %v1423 = vsel %vm1422, %v1415, %v1419
    %v1424 = vand.u32 2147483647, %v1408
    %vm1425 = vcmp.eq.f32.partialorder %v1424, 8.507059e+37
    %v1426 = vand.u32 %v1408, 2147483648
    %v1427 = vor.u32 1.1754944e-38, %v1426
    %v1428 = vsel %vm1425, %v1427, %v1423
    %v1429 = vmul.f32 %v1401, %v1428
    %v1430 = vrcp.pop %v1411
    %v1431 = vmul.f32 %v1411, %v1430
    %v1432 = vsub.f32 1.0, %v1431
    %v1433 = vmul.f32 %v1430, %v1432
    %v1434 = vadd.f32 %v1430, %v1433
    %vm1435 = vweird.f32 %v1411
    %vm1436 = vweird.f32 %v1430
    %vm1437 = vmor %vm1435, %vm1436
    %v1438 = vsel %vm1437, %v1430, %v1434
    %v1439 = vand.u32 2147483647, %v1411
    %vm1440 = vcmp.eq.f32.partialorder %v1439, 8.507059e+37
    %v1441 = vand.u32 %v1411, 2147483648
    %v1442 = vor.u32 1.1754944e-38, %v1441
    %v1443 = vsel %vm1440, %v1442, %v1438
    %v1444 = vmul.f32 %v1403, %v1443
    %v1445 = vrcp.pop %v1414
    %v1446 = vmul.f32 %v1414, %v1445
    %v1447 = vsub.f32 1.0, %v1446
    %v1448 = vmul.f32 %v1445, %v1447
    %v1449 = vadd.f32 %v1445, %v1448
    %vm1450 = vweird.f32 %v1414
    %vm1451 = vweird.f32 %v1445
    %vm1452 = vmor %vm1450, %vm1451
    %v1453 = vsel %vm1452, %v1445, %v1449
    %v1454 = vand.u32 2147483647, %v1414
    %vm1455 = vcmp.eq.f32.partialorder %v1454, 8.507059e+37
    %v1456 = vand.u32 %v1414, 2147483648
    %v1457 = vor.u32 1.1754944e-38, %v1456
    %v1458 = vsel %vm1455, %v1457, %v1453
    %v1459 = vmul.f32 %v1405, %v1458
    %v1460 = vpack.c.bf16 %v1444, %v1429
    %v1461 = vpack.c.bf16 %v1459, %v1459
    %1464 = vrot.lane.b32.xlu0 %v1311, 64
    %v1465 = vpop.permute.xlu0 %1464
    %1466 = vrot.lane.b32.xlu0 %v1312, 64
    %v1467 = vpop.permute.xlu0 %1466
    %v1470 = vsel %vm249, %v1460, 0
    %v1473 = vsel %vm249, %v1461, 0
    %v1476 = vsel %vm224, %v1467, 0
    %1478 = vmatpush.bf16.msra.mxu0 0
    %1479 = vmatpush.bf16.msra.mxu0 0
    %1480 = vmatpush.bf16.msra.mxu0 0
    %1481 = vmatpush.bf16.msra.mxu0 0
    %1482 = vmatpush.bf16.msra.mxu0 0
    %1483 = vmatpush.bf16.msra.mxu0 0
    %1484 = vmatpush.bf16.msra.mxu0 %v1476
    %1485 = vmatpush.bf16.msra.mxu0 %v1465
    %1486 = vmatmul.bf16.gmra.mxu0 %v1470
    %v1487 = vpop.f32.mrf.mxu0
    %v1488 = vadd.f32 0.0, %v1487
    %v1489 = vpop.f32.mrf.mxu0
    %v1490 = vadd.f32 0.0, %v1489
    %1491 = vmatmul.bf16.gmra.mxu0 %v1473
    %v1492 = vpop.f32.mrf.mxu0
    %v1493 = vadd.f32 0.0, %v1492
    %v1494 = vpop.f32.mrf.mxu0
    %1495 = vdwg.mxu0
    %1496 = vrot.lane.b32.xlu0 %v1303, 88
    %v1497 = vpop.permute.xlu0 %1496
    %1498 = vrot.lane.b32.xlu0 %v1305, 88
    %v1499 = vpop.permute.xlu0 %1498
    %1500 = vrot.lane.b32.xlu0 %v1308, 88
    %v1501 = vpop.permute.xlu0 %1500
    %1505 = vxpose.xlu0.b32.start [1/16] %v1497, 128
    %1506 = vxpose.xlu0.b32.cont [2/16] %v1499, 128
    %1507 = vxpose.xlu0.b32.cont [3/16] %v1501, 128
    %1508 = vxpose.xlu0.b32.cont [4/16] 0.0, 128
    %1509 = vxpose.xlu0.b32.cont [5/16] 0.0, 128
    %1510 = vxpose.xlu0.b32.cont [6/16] 0.0, 128
    %1511 = vxpose.xlu0.b32.cont [7/16] 0.0, 128
    %1512 = vxpose.xlu0.b32.cont [8/16] 0.0, 128
    %1513 = vxpose.xlu0.b32.cont [9/16] 0.0, 128
    %1514 = vxpose.xlu0.b32.cont [10/16] 0.0, 128
    %1515 = vxpose.xlu0.b32.cont [11/16] 0.0, 128
    %1516 = vxpose.xlu0.b32.cont [12/16] 0.0, 128
    %1517 = vxpose.xlu0.b32.cont [13/16] 0.0, 128
    %1518 = vxpose.xlu0.b32.cont [14/16] 0.0, 128
    %1519 = vxpose.xlu0.b32.cont [15/16] 0.0, 128
    %1520 = vxpose.xlu0.b32.end [16/16] 0.0, 128
    %v1521 = vpop.trf.xlu0
    %v1522 = vpop.trf.xlu0
    %v1523 = vpop.trf.xlu0
    %v1524 = vpop.trf.xlu0
    %v1525 = vpop.trf.xlu0
    %v1526 = vpop.trf.xlu0
    %v1527 = vpop.trf.xlu0
    %v1528 = vpop.trf.xlu0
    %v1529 = vpop.trf.xlu0
    %v1530 = vpop.trf.xlu0
    %v1531 = vpop.trf.xlu0
    %v1532 = vpop.trf.xlu0
    %v1533 = vpop.trf.xlu0
    %v1534 = vpop.trf.xlu0
    %v1535 = vpop.trf.xlu0
    %v1536 = vpop.trf.xlu0
    %v1537 = vpack.c.bf16 %v1521, %v1521
    %1538 = vrot.lane.b32.xlu0 %v1311, 120
    %v1539 = vpop.permute.xlu0 %1538
    %1540 = vrot.lane.b32.xlu0 %v1312, 120
    %v1541 = vpop.permute.xlu0 %1540
    %v1543 = vsel %vm217, %v1539, 0
    %v1546 = vsel %vm217, %v1541, 0
    %v1549 = vsel %vm224, %v1537, 0
    %1551 = vmatpush.bf16.msra.mxu0 0
    %1552 = vmatpush.bf16.msra.mxu0 0
    %1553 = vmatpush.bf16.msra.mxu0 0
    %1554 = vmatpush.bf16.msra.mxu0 0
    %1555 = vmatpush.bf16.msra.mxu0 0
    %1556 = vmatpush.bf16.msra.mxu0 0
    %1557 = vmatpush.bf16.msra.mxu0 0
    %1558 = vmatpush.bf16.msra.mxu0 %v1549
    %1559 = vmatmul.bf16.gmra.mxu0 %v1543
    %v1560 = vpop.f32.mrf.mxu0
    %v1561 = vadd.f32 0.0, %v1560
    %v1562 = vpop.f32.mrf.mxu0
    %v1563 = vadd.f32 0.0, %v1562
    %1564 = vmatmul.bf16.gmra.mxu0 %v1546
    %v1565 = vpop.f32.mrf.mxu0
    %v1566 = vadd.f32 0.0, %v1565
    %v1567 = vpop.f32.mrf.mxu0
    %1568 = vdwg.mxu0
    %v1569 = vsel %vm99, %v1561, -1e+30
    %v1570 = vsel %vm100, %v1563, -1e+30
    %v1571 = vsel %vm101, %v1566, -1e+30
    %v1572 = vsel %vm249, %v1569, -inf
    %1573 = vmax.xlane.f32.xlu0 %v1572
    %v1574 = vpop.xlane.xlu0 %1573
    %v1575 = vsel %vm249, %v1570, -inf
    %1576 = vmax.xlane.f32.xlu0 %v1575
    %v1577 = vpop.xlane.xlu0 %1576
    %v1578 = vsel %vm249, %v1571, -inf
    %1579 = vmax.xlane.f32.xlu0 %v1578
    %v1580 = vpop.xlane.xlu0 %1579
    %v1581 = vsub.f32 %v1569, %v1574
    %v1582 = vsub.f32 %v1570, %v1577
    %v1583 = vsub.f32 %v1571, %v1580
    %v1584 = vmul.f32 %v1581, 1.442695
    %v1585 = vpow.pop %v1584
    %v1586 = vmul.f32 %v1582, 1.442695
    %v1587 = vpow.pop %v1586
    %v1588 = vmul.f32 %v1583, 1.442695
    %v1589 = vpow.pop %v1588
    %v1590 = vsel %vm249, %v1585, 0.0
    %1591 = vadd.xlane.f32.xlu0 %v1590
    %v1592 = vpop.xlane.xlu0 %1591
    %v1593 = vsel %vm249, %v1587, 0.0
    %1594 = vadd.xlane.f32.xlu0 %v1593
    %v1595 = vpop.xlane.xlu0 %1594
    %v1596 = vsel %vm249, %v1589, 0.0
    %1597 = vadd.xlane.f32.xlu0 %v1596
    %v1598 = vpop.xlane.xlu0 %1597
    %v1599 = vrcp.pop %v1592
    %v1600 = vmul.f32 %v1592, %v1599
    %v1601 = vsub.f32 1.0, %v1600
    %v1602 = vmul.f32 %v1599, %v1601
    %v1603 = vadd.f32 %v1599, %v1602
    %vm1604 = vweird.f32 %v1592
    %vm1605 = vweird.f32 %v1599
    %vm1606 = vmor %vm1604, %vm1605
    %v1607 = vsel %vm1606, %v1599, %v1603
    %v1608 = vand.u32 2147483647, %v1592
    %vm1609 = vcmp.eq.f32.partialorder %v1608, 8.507059e+37
    %v1610 = vand.u32 %v1592, 2147483648
    %v1611 = vor.u32 1.1754944e-38, %v1610
    %v1612 = vsel %vm1609, %v1611, %v1607
    %v1613 = vmul.f32 %v1585, %v1612
    %v1614 = vrcp.pop %v1595
    %v1615 = vmul.f32 %v1595, %v1614
    %v1616 = vsub.f32 1.0, %v1615
    %v1617 = vmul.f32 %v1614, %v1616
    %v1618 = vadd.f32 %v1614, %v1617
    %vm1619 = vweird.f32 %v1595
    %vm1620 = vweird.f32 %v1614
    %vm1621 = vmor %vm1619, %vm1620
    %v1622 = vsel %vm1621, %v1614, %v1618
    %v1623 = vand.u32 2147483647, %v1595
    %vm1624 = vcmp.eq.f32.partialorder %v1623, 8.507059e+37
    %v1625 = vand.u32 %v1595, 2147483648
    %v1626 = vor.u32 1.1754944e-38, %v1625
    %v1627 = vsel %vm1624, %v1626, %v1622
    %v1628 = vmul.f32 %v1587, %v1627
    %v1629 = vrcp.pop %v1598
    %v1630 = vmul.f32 %v1598, %v1629
    %v1631 = vsub.f32 1.0, %v1630
    %v1632 = vmul.f32 %v1629, %v1631
    %v1633 = vadd.f32 %v1629, %v1632
    %vm1634 = vweird.f32 %v1598
    %vm1635 = vweird.f32 %v1629
    %vm1636 = vmor %vm1634, %vm1635
    %v1637 = vsel %vm1636, %v1629, %v1633
    %v1638 = vand.u32 2147483647, %v1598
    %vm1639 = vcmp.eq.f32.partialorder %v1638, 8.507059e+37
    %v1640 = vand.u32 %v1598, 2147483648
    %v1641 = vor.u32 1.1754944e-38, %v1640
    %v1642 = vsel %vm1639, %v1641, %v1637
    %v1643 = vmul.f32 %v1589, %v1642
    %v1644 = vpack.c.bf16 %v1628, %v1613
    %v1645 = vpack.c.bf16 %v1643, %v1643
    %1646 = vrot.lane.b32.xlu0 %v1311, 56
    %v1647 = vpop.permute.xlu0 %1646
    %1648 = vrot.lane.b32.xlu0 %v1312, 56
    %v1649 = vpop.permute.xlu0 %1648
    %v1652 = vsel %vm249, %v1644, 0
    %v1655 = vsel %vm249, %v1645, 0
    %v1658 = vsel %vm224, %v1649, 0
    %1660 = vmatpush.bf16.msra.mxu0 0
    %1661 = vmatpush.bf16.msra.mxu0 0
    %1662 = vmatpush.bf16.msra.mxu0 0
    %1663 = vmatpush.bf16.msra.mxu0 0
    %1664 = vmatpush.bf16.msra.mxu0 0
    %1665 = vmatpush.bf16.msra.mxu0 0
    %1666 = vmatpush.bf16.msra.mxu0 %v1658
    %1667 = vmatpush.bf16.msra.mxu0 %v1647
    %1668 = vmatmul.bf16.gmra.mxu0 %v1652
    %v1669 = vpop.f32.mrf.mxu0
    %v1670 = vadd.f32 0.0, %v1669
    %v1671 = vpop.f32.mrf.mxu0
    %v1672 = vadd.f32 0.0, %v1671
    %1673 = vmatmul.bf16.gmra.mxu0 %v1655
    %v1674 = vpop.f32.mrf.mxu0
    %v1675 = vadd.f32 0.0, %v1674
    %v1676 = vpop.f32.mrf.mxu0
    %1677 = vdwg.mxu0
    %1678 = vrot.lane.b32.xlu0 %v1303, 80
    %v1679 = vpop.permute.xlu0 %1678
    %1680 = vrot.lane.b32.xlu0 %v1305, 80
    %v1681 = vpop.permute.xlu0 %1680
    %1682 = vrot.lane.b32.xlu0 %v1308, 80
    %v1683 = vpop.permute.xlu0 %1682
    %1687 = vxpose.xlu0.b32.start [1/16] %v1679, 128
    %1688 = vxpose.xlu0.b32.cont [2/16] %v1681, 128
    %1689 = vxpose.xlu0.b32.cont [3/16] %v1683, 128
    %1690 = vxpose.xlu0.b32.cont [4/16] 0.0, 128
    %1691 = vxpose.xlu0.b32.cont [5/16] 0.0, 128
    %1692 = vxpose.xlu0.b32.cont [6/16] 0.0, 128
    %1693 = vxpose.xlu0.b32.cont [7/16] 0.0, 128
    %1694 = vxpose.xlu0.b32.cont [8/16] 0.0, 128
    %1695 = vxpose.xlu0.b32.cont [9/16] 0.0, 128
    %1696 = vxpose.xlu0.b32.cont [10/16] 0.0, 128
    %1697 = vxpose.xlu0.b32.cont [11/16] 0.0, 128
    %1698 = vxpose.xlu0.b32.cont [12/16] 0.0, 128
    %1699 = vxpose.xlu0.b32.cont [13/16] 0.0, 128
    %1700 = vxpose.xlu0.b32.cont [14/16] 0.0, 128
    %1701 = vxpose.xlu0.b32.cont [15/16] 0.0, 128
    %1702 = vxpose.xlu0.b32.end [16/16] 0.0, 128
    %v1703 = vpop.trf.xlu0
    %v1704 = vpop.trf.xlu0
    %v1705 = vpop.trf.xlu0
    %v1706 = vpop.trf.xlu0
    %v1707 = vpop.trf.xlu0
    %v1708 = vpop.trf.xlu0
    %v1709 = vpop.trf.xlu0
    %v1710 = vpop.trf.xlu0
    %v1711 = vpop.trf.xlu0
    %v1712 = vpop.trf.xlu0
    %v1713 = vpop.trf.xlu0
    %v1714 = vpop.trf.xlu0
    %v1715 = vpop.trf.xlu0
    %v1716 = vpop.trf.xlu0
    %v1717 = vpop.trf.xlu0
    %v1718 = vpop.trf.xlu0
    %v1719 = vpack.c.bf16 %v1703, %v1703
    %1720 = vrot.lane.b32.xlu0 %v1311, 112
    %v1721 = vpop.permute.xlu0 %1720
    %1722 = vrot.lane.b32.xlu0 %v1312, 112
    %v1723 = vpop.permute.xlu0 %1722
    %v1725 = vsel %vm217, %v1721, 0
    %v1728 = vsel %vm217, %v1723, 0
    %v1731 = vsel %vm224, %v1719, 0
    %1733 = vmatpush.bf16.msra.mxu0 0
    %1734 = vmatpush.bf16.msra.mxu0 0
    %1735 = vmatpush.bf16.msra.mxu0 0
    %1736 = vmatpush.bf16.msra.mxu0 0
    %1737 = vmatpush.bf16.msra.mxu0 0
    %1738 = vmatpush.bf16.msra.mxu0 0
    %1739 = vmatpush.bf16.msra.mxu0 0
    %1740 = vmatpush.bf16.msra.mxu0 %v1731
    %1741 = vmatmul.bf16.gmra.mxu0 %v1725
    %v1742 = vpop.f32.mrf.mxu0
    %v1743 = vadd.f32 0.0, %v1742
    %v1744 = vpop.f32.mrf.mxu0
    %v1745 = vadd.f32 0.0, %v1744
    %1746 = vmatmul.bf16.gmra.mxu0 %v1728
    %v1747 = vpop.f32.mrf.mxu0
    %v1748 = vadd.f32 0.0, %v1747
    %v1749 = vpop.f32.mrf.mxu0
    %1750 = vdwg.mxu0
    %v1751 = vsel %vm99, %v1743, -1e+30
    %v1752 = vsel %vm100, %v1745, -1e+30
    %v1753 = vsel %vm101, %v1748, -1e+30
    %v1754 = vsel %vm249, %v1751, -inf
    %1755 = vmax.xlane.f32.xlu0 %v1754
    %v1756 = vpop.xlane.xlu0 %1755
    %v1757 = vsel %vm249, %v1752, -inf
    %1758 = vmax.xlane.f32.xlu0 %v1757
    %v1759 = vpop.xlane.xlu0 %1758
    %v1760 = vsel %vm249, %v1753, -inf
    %1761 = vmax.xlane.f32.xlu0 %v1760
    %v1762 = vpop.xlane.xlu0 %1761
    %v1763 = vsub.f32 %v1751, %v1756
    %v1764 = vsub.f32 %v1752, %v1759
    %v1765 = vsub.f32 %v1753, %v1762
    %v1766 = vmul.f32 %v1763, 1.442695
    %v1767 = vpow.pop %v1766
    %v1768 = vmul.f32 %v1764, 1.442695
    %v1769 = vpow.pop %v1768
    %v1770 = vmul.f32 %v1765, 1.442695
    %v1771 = vpow.pop %v1770
    %v1772 = vsel %vm249, %v1767, 0.0
    %1773 = vadd.xlane.f32.xlu0 %v1772
    %v1774 = vpop.xlane.xlu0 %1773
    %v1775 = vsel %vm249, %v1769, 0.0
    %1776 = vadd.xlane.f32.xlu0 %v1775
    %v1777 = vpop.xlane.xlu0 %1776
    %v1778 = vsel %vm249, %v1771, 0.0
    %1779 = vadd.xlane.f32.xlu0 %v1778
    %v1780 = vpop.xlane.xlu0 %1779
    %v1781 = vrcp.pop %v1774
    %v1782 = vmul.f32 %v1774, %v1781
    %v1783 = vsub.f32 1.0, %v1782
    %v1784 = vmul.f32 %v1781, %v1783
    %v1785 = vadd.f32 %v1781, %v1784
    %vm1786 = vweird.f32 %v1774
    %vm1787 = vweird.f32 %v1781
    %vm1788 = vmor %vm1786, %vm1787
    %v1789 = vsel %vm1788, %v1781, %v1785
    %v1790 = vand.u32 2147483647, %v1774
    %vm1791 = vcmp.eq.f32.partialorder %v1790, 8.507059e+37
    %v1792 = vand.u32 %v1774, 2147483648
    %v1793 = vor.u32 1.1754944e-38, %v1792
    %v1794 = vsel %vm1791, %v1793, %v1789
    %v1795 = vmul.f32 %v1767, %v1794
    %v1796 = vrcp.pop %v1777
    %v1797 = vmul.f32 %v1777, %v1796
    %v1798 = vsub.f32 1.0, %v1797
    %v1799 = vmul.f32 %v1796, %v1798
    %v1800 = vadd.f32 %v1796, %v1799
    %vm1801 = vweird.f32 %v1777
    %vm1802 = vweird.f32 %v1796
    %vm1803 = vmor %vm1801, %vm1802
    %v1804 = vsel %vm1803, %v1796, %v1800
    %v1805 = vand.u32 2147483647, %v1777
    %vm1806 = vcmp.eq.f32.partialorder %v1805, 8.507059e+37
    %v1807 = vand.u32 %v1777, 2147483648
    %v1808 = vor.u32 1.1754944e-38, %v1807
    %v1809 = vsel %vm1806, %v1808, %v1804
    %v1810 = vmul.f32 %v1769, %v1809
    %v1811 = vrcp.pop %v1780
    %v1812 = vmul.f32 %v1780, %v1811
    %v1813 = vsub.f32 1.0, %v1812
    %v1814 = vmul.f32 %v1811, %v1813
    %v1815 = vadd.f32 %v1811, %v1814
    %vm1816 = vweird.f32 %v1780
    %vm1817 = vweird.f32 %v1811
    %vm1818 = vmor %vm1816, %vm1817
    %v1819 = vsel %vm1818, %v1811, %v1815
    %v1820 = vand.u32 2147483647, %v1780
    %vm1821 = vcmp.eq.f32.partialorder %v1820, 8.507059e+37
    %v1822 = vand.u32 %v1780, 2147483648
    %v1823 = vor.u32 1.1754944e-38, %v1822
    %v1824 = vsel %vm1821, %v1823, %v1819
    %v1825 = vmul.f32 %v1771, %v1824
    %v1826 = vpack.c.bf16 %v1810, %v1795
    %v1827 = vpack.c.bf16 %v1825, %v1825
    %1828 = vrot.lane.b32.xlu0 %v1311, 48
    %v1829 = vpop.permute.xlu0 %1828
    %1830 = vrot.lane.b32.xlu0 %v1312, 48
    %v1831 = vpop.permute.xlu0 %1830
    %v1834 = vsel %vm249, %v1826, 0
    %v1837 = vsel %vm249, %v1827, 0
    %v1840 = vsel %vm224, %v1831, 0
    %1842 = vmatpush.bf16.msra.mxu0 0
    %1843 = vmatpush.bf16.msra.mxu0 0
    %1844 = vmatpush.bf16.msra.mxu0 0
    %1845 = vmatpush.bf16.msra.mxu0 0
    %1846 = vmatpush.bf16.msra.mxu0 0
    %1847 = vmatpush.bf16.msra.mxu0 0
    %1848 = vmatpush.bf16.msra.mxu0 %v1840
    %1849 = vmatpush.bf16.msra.mxu0 %v1829
    %1850 = vmatmul.bf16.gmra.mxu0 %v1834
    %v1851 = vpop.f32.mrf.mxu0
    %v1852 = vadd.f32 0.0, %v1851
    %v1853 = vpop.f32.mrf.mxu0
    %v1854 = vadd.f32 0.0, %v1853
    %1855 = vmatmul.bf16.gmra.mxu0 %v1837
    %v1856 = vpop.f32.mrf.mxu0
    %v1857 = vadd.f32 0.0, %v1856
    %v1858 = vpop.f32.mrf.mxu0
    %1859 = vdwg.mxu0
    %1860 = vrot.lane.b32.xlu0 %v1303, 72
    %v1861 = vpop.permute.xlu0 %1860
    %1862 = vrot.lane.b32.xlu0 %v1305, 72
    %v1863 = vpop.permute.xlu0 %1862
    %1864 = vrot.lane.b32.xlu0 %v1308, 72
    %v1865 = vpop.permute.xlu0 %1864
    %1869 = vxpose.xlu0.b32.start [1/16] %v1861, 128
    %1870 = vxpose.xlu0.b32.cont [2/16] %v1863, 128
    %1871 = vxpose.xlu0.b32.cont [3/16] %v1865, 128
    %1872 = vxpose.xlu0.b32.cont [4/16] 0.0, 128
    %1873 = vxpose.xlu0.b32.cont [5/16] 0.0, 128
    %1874 = vxpose.xlu0.b32.cont [6/16] 0.0, 128
    %1875 = vxpose.xlu0.b32.cont [7/16] 0.0, 128
    %1876 = vxpose.xlu0.b32.cont [8/16] 0.0, 128
    %1877 = vxpose.xlu0.b32.cont [9/16] 0.0, 128
    %1878 = vxpose.xlu0.b32.cont [10/16] 0.0, 128
    %1879 = vxpose.xlu0.b32.cont [11/16] 0.0, 128
    %1880 = vxpose.xlu0.b32.cont [12/16] 0.0, 128
    %1881 = vxpose.xlu0.b32.cont [13/16] 0.0, 128
    %1882 = vxpose.xlu0.b32.cont [14/16] 0.0, 128
    %1883 = vxpose.xlu0.b32.cont [15/16] 0.0, 128
    %1884 = vxpose.xlu0.b32.end [16/16] 0.0, 128
    %v1885 = vpop.trf.xlu0
    %v1886 = vpop.trf.xlu0
    %v1887 = vpop.trf.xlu0
    %v1888 = vpop.trf.xlu0
    %v1889 = vpop.trf.xlu0
    %v1890 = vpop.trf.xlu0
    %v1891 = vpop.trf.xlu0
    %v1892 = vpop.trf.xlu0
    %v1893 = vpop.trf.xlu0
    %v1894 = vpop.trf.xlu0
    %v1895 = vpop.trf.xlu0
    %v1896 = vpop.trf.xlu0
    %v1897 = vpop.trf.xlu0
    %v1898 = vpop.trf.xlu0
    %v1899 = vpop.trf.xlu0
    %v1900 = vpop.trf.xlu0
    %v1901 = vpack.c.bf16 %v1885, %v1885
    %1902 = vrot.lane.b32.xlu0 %v1311, 104
    %v1903 = vpop.permute.xlu0 %1902
    %1904 = vrot.lane.b32.xlu0 %v1312, 104
    %v1905 = vpop.permute.xlu0 %1904
    %v1907 = vsel %vm217, %v1903, 0
    %v1910 = vsel %vm217, %v1905, 0
    %v1913 = vsel %vm224, %v1901, 0
    %1915 = vmatpush.bf16.msra.mxu0 0
    %1916 = vmatpush.bf16.msra.mxu0 0
    %1917 = vmatpush.bf16.msra.mxu0 0
    %1918 = vmatpush.bf16.msra.mxu0 0
    %1919 = vmatpush.bf16.msra.mxu0 0
    %1920 = vmatpush.bf16.msra.mxu0 0
    %1921 = vmatpush.bf16.msra.mxu0 0
    %1922 = vmatpush.bf16.msra.mxu0 %v1913
    %1923 = vmatmul.bf16.gmra.mxu0 %v1907
    %v1924 = vpop.f32.mrf.mxu0
    %v1925 = vadd.f32 0.0, %v1924
    %v1926 = vpop.f32.mrf.mxu0
    %v1927 = vadd.f32 0.0, %v1926
    %1928 = vmatmul.bf16.gmra.mxu0 %v1910
    %v1929 = vpop.f32.mrf.mxu0
    %v1930 = vadd.f32 0.0, %v1929
    %v1931 = vpop.f32.mrf.mxu0
    %1932 = vdwg.mxu0
    %v1933 = vsel %vm99, %v1925, -1e+30
    %v1934 = vsel %vm100, %v1927, -1e+30
    %v1935 = vsel %vm101, %v1930, -1e+30
    %v1936 = vsel %vm249, %v1933, -inf
    %1937 = vmax.xlane.f32.xlu0 %v1936
    %v1938 = vpop.xlane.xlu0 %1937
    %v1939 = vsel %vm249, %v1934, -inf
    %1940 = vmax.xlane.f32.xlu0 %v1939
    %v1941 = vpop.xlane.xlu0 %1940
    %v1942 = vsel %vm249, %v1935, -inf
    %1943 = vmax.xlane.f32.xlu0 %v1942
    %v1944 = vpop.xlane.xlu0 %1943
    %v1945 = vsub.f32 %v1933, %v1938
    %v1946 = vsub.f32 %v1934, %v1941
    %v1947 = vsub.f32 %v1935, %v1944
    %v1948 = vmul.f32 %v1945, 1.442695
    %v1949 = vpow.pop %v1948
    %v1950 = vmul.f32 %v1946, 1.442695
    %v1951 = vpow.pop %v1950
    %v1952 = vmul.f32 %v1947, 1.442695
    %v1953 = vpow.pop %v1952
    %v1954 = vsel %vm249, %v1949, 0.0
    %1955 = vadd.xlane.f32.xlu0 %v1954
    %v1956 = vpop.xlane.xlu0 %1955
    %v1957 = vsel %vm249, %v1951, 0.0
    %1958 = vadd.xlane.f32.xlu0 %v1957
    %v1959 = vpop.xlane.xlu0 %1958
    %v1960 = vsel %vm249, %v1953, 0.0
    %1961 = vadd.xlane.f32.xlu0 %v1960
    %v1962 = vpop.xlane.xlu0 %1961
    %v1963 = vrcp.pop %v1956
    %v1964 = vmul.f32 %v1956, %v1963
    %v1965 = vsub.f32 1.0, %v1964
    %v1966 = vmul.f32 %v1963, %v1965
    %v1967 = vadd.f32 %v1963, %v1966
    %vm1968 = vweird.f32 %v1956
    %vm1969 = vweird.f32 %v1963
    %vm1970 = vmor %vm1968, %vm1969
    %v1971 = vsel %vm1970, %v1963, %v1967
    %v1972 = vand.u32 2147483647, %v1956
    %vm1973 = vcmp.eq.f32.partialorder %v1972, 8.507059e+37
    %v1974 = vand.u32 %v1956, 2147483648
    %v1975 = vor.u32 1.1754944e-38, %v1974
    %v1976 = vsel %vm1973, %v1975, %v1971
    %v1977 = vmul.f32 %v1949, %v1976
    %v1978 = vrcp.pop %v1959
    %v1979 = vmul.f32 %v1959, %v1978
    %v1980 = vsub.f32 1.0, %v1979
    %v1981 = vmul.f32 %v1978, %v1980
    %v1982 = vadd.f32 %v1978, %v1981
    %vm1983 = vweird.f32 %v1959
    %vm1984 = vweird.f32 %v1978
    %vm1985 = vmor %vm1983, %vm1984
    %v1986 = vsel %vm1985, %v1978, %v1982
    %v1987 = vand.u32 2147483647, %v1959
    %vm1988 = vcmp.eq.f32.partialorder %v1987, 8.507059e+37
    %v1989 = vand.u32 %v1959, 2147483648
    %v1990 = vor.u32 1.1754944e-38, %v1989
    %v1991 = vsel %vm1988, %v1990, %v1986
    %v1992 = vmul.f32 %v1951, %v1991
    %v1993 = vrcp.pop %v1962
    %v1994 = vmul.f32 %v1962, %v1993
    %v1995 = vsub.f32 1.0, %v1994
    %v1996 = vmul.f32 %v1993, %v1995
    %v1997 = vadd.f32 %v1993, %v1996
    %vm1998 = vweird.f32 %v1962
    %vm1999 = vweird.f32 %v1993
    %vm2000 = vmor %vm1998, %vm1999
    %v2001 = vsel %vm2000, %v1993, %v1997
    %v2002 = vand.u32 2147483647, %v1962
    %vm2003 = vcmp.eq.f32.partialorder %v2002, 8.507059e+37
    %v2004 = vand.u32 %v1962, 2147483648
    %v2005 = vor.u32 1.1754944e-38, %v2004
    %v2006 = vsel %vm2003, %v2005, %v2001
    %v2007 = vmul.f32 %v1953, %v2006
    %v2008 = vpack.c.bf16 %v1992, %v1977
    %v2009 = vpack.c.bf16 %v2007, %v2007
    %2010 = vrot.lane.b32.xlu0 %v1311, 40
    %v2011 = vpop.permute.xlu0 %2010
    %2012 = vrot.lane.b32.xlu0 %v1312, 40
    %v2013 = vpop.permute.xlu0 %2012
    %v2016 = vsel %vm249, %v2008, 0
    %v2019 = vsel %vm249, %v2009, 0
    %v2022 = vsel %vm224, %v2013, 0
    %2024 = vmatpush.bf16.msra.mxu0 0
    %2025 = vmatpush.bf16.msra.mxu0 0
    %2026 = vmatpush.bf16.msra.mxu0 0
    %2027 = vmatpush.bf16.msra.mxu0 0
    %2028 = vmatpush.bf16.msra.mxu0 0
    %2029 = vmatpush.bf16.msra.mxu0 0
    %2030 = vmatpush.bf16.msra.mxu0 %v2022
    %2031 = vmatpush.bf16.msra.mxu0 %v2011
    %2032 = vmatmul.bf16.gmra.mxu0 %v2016
    %v2033 = vpop.f32.mrf.mxu0
    %v2034 = vadd.f32 0.0, %v2033
    %v2035 = vpop.f32.mrf.mxu0
    %v2036 = vadd.f32 0.0, %v2035
    %2037 = vmatmul.bf16.gmra.mxu0 %v2019
    %v2038 = vpop.f32.mrf.mxu0
    %v2039 = vadd.f32 0.0, %v2038
    %v2040 = vpop.f32.mrf.mxu0
    %2041 = vdwg.mxu0
    %2045 = vrot.lane.b32.xlu0 %v1670, 8
    %v2046 = vpop.permute.xlu0 %2045
    %2047 = vrot.lane.b32.xlu0 %v1672, 8
    %v2048 = vpop.permute.xlu0 %2047
    %2049 = vrot.lane.b32.xlu0 %v1675, 8
    %v2050 = vpop.permute.xlu0 %2049
    %2057 = vrot.lane.b32.xlu0 %v1852, 16
    %v2058 = vpop.permute.xlu0 %2057
    %2059 = vrot.lane.b32.xlu0 %v1854, 16
    %v2060 = vpop.permute.xlu0 %2059
    %2061 = vrot.lane.b32.xlu0 %v1857, 16
    %v2062 = vpop.permute.xlu0 %2061
    %2069 = vrot.lane.b32.xlu0 %v2034, 24
    %v2070 = vpop.permute.xlu0 %2069
    %2071 = vrot.lane.b32.xlu0 %v2036, 24
    %v2072 = vpop.permute.xlu0 %2071
    %2073 = vrot.lane.b32.xlu0 %v2039, 24
    %v2074 = vpop.permute.xlu0 %2073
    %v2078 = vsel %vm217, %v1488, %v2046
    %v2079 = vsel %vm217, %v1490, %v2048
    %v2080 = vsel %vm217, %v1493, %v2050
    %v2081 = vsel %vm943, %v2078, %v2058
    %v2082 = vsel %vm943, %v2079, %v2060
    %v2083 = vsel %vm943, %v2080, %v2062
    %v2084 = vsel %vm249, %v2081, %v2070
    %v2085 = vsel %vm249, %v2082, %v2072
    %v2086 = vsel %vm249, %v2083, %v2074
    %v2087 = vpack.c.bf16 %v2085, %v2084
    %v2088 = vpack.c.bf16 %v2086, %v2086
    %v2089 = vperm.slane %v1265, 0
    %v2094 = vunpack.c.l.b16 %v1248
    %v2095 = vunpack.c.l.b16 %v1249
    %v2096 = vunpack.c.l.b16 %v1250
    %v2097 = vunpack.c.l.b16 %v1251
    %v2098 = vpack.c.b16 %v2095, %v2094
    %v2099 = vpack.c.b16 %v2097, %v2096
    %v2103 = vsel %vm145, %v2087, 0
    %v2106 = vsel %vm145, %v2088, 0
    %2108 = vmatpush.bf16.msra.mxu0 0
    %2109 = vmatpush.bf16.msra.mxu0 0
    %2110 = vmatpush.bf16.msra.mxu0 0
    %2111 = vmatpush.bf16.msra.mxu0 0
    %2112 = vmatpush.bf16.msra.mxu0 0
    %2113 = vmatpush.bf16.msra.mxu0 0
    %2114 = vmatpush.bf16.msra.mxu0 %v2099
    %2115 = vmatpush.bf16.msra.mxu0 %v2098
    %2116 = vmatmul.bf16.gmra.mxu0 %v2103
    %v2117 = vpop.f32.mrf.mxu0
    %v2118 = vadd.f32 %v2089, %v2117
    %v2119 = vpop.f32.mrf.mxu0
    %v2120 = vadd.f32 %v2089, %v2119
    %2121 = vmatmul.bf16.gmra.mxu0 %v2106
    %v2122 = vpop.f32.mrf.mxu0
    %v2123 = vadd.f32 %v2089, %v2122
    %v2124 = vpop.f32.mrf.mxu0
    %2125 = vdwg.mxu0
    %v2126 = vadd.f32 %v1241, %v2118
    %v2127 = vadd.f32 %v1242, %v2120
    %v2128 = vadd.f32 %v1243, %v2123
    %v2129 = vsel %vm145, %v2126, 0.0
    %2130 = vadd.xlane.f32.xlu0 %v2129
    %v2131 = vpop.xlane.xlu0 %2130
    %v2132 = vsel %vm145, %v2127, 0.0
    %2133 = vadd.xlane.f32.xlu0 %v2132
    %v2134 = vpop.xlane.xlu0 %2133
    %v2135 = vsel %vm145, %v2128, 0.0
    %2136 = vadd.xlane.f32.xlu0 %v2135
    %v2137 = vpop.xlane.xlu0 %2136
    %v2138 = vmul.f32 %v2131, %v1007
    %v2139 = vmul.f32 %v2134, %v1007
    %v2140 = vmul.f32 %v2137, %v1007
    %v2141 = vsub.f32 %v2126, %v2138
    %v2142 = vsub.f32 %v2127, %v2139
    %v2143 = vsub.f32 %v2128, %v2140
    %v2144 = vmul.f32 %v2141, %v2141
    %v2145 = vmul.f32 %v2142, %v2142
    %v2146 = vmul.f32 %v2143, %v2143
    %v2147 = vsel %vm145, %v2144, 0.0
    %2148 = vadd.xlane.f32.xlu0 %v2147
    %v2149 = vpop.xlane.xlu0 %2148
    %v2150 = vsel %vm145, %v2145, 0.0
    %2151 = vadd.xlane.f32.xlu0 %v2150
    %v2152 = vpop.xlane.xlu0 %2151
    %v2153 = vsel %vm145, %v2146, 0.0
    %2154 = vadd.xlane.f32.xlu0 %v2153
    %v2155 = vpop.xlane.xlu0 %2154
    %v2156 = vmul.f32 %v2149, %v1007
    %v2157 = vmul.f32 %v2152, %v1007
    %v2158 = vmul.f32 %v2155, %v1007
    %v2159 = vadd.f32 %v2156, 1e-05
    %v2160 = vadd.f32 %v2157, 1e-05
    %v2161 = vadd.f32 %v2158, 1e-05
    %v2162 = vrsqrt.pop %v2159
    %v2163 = vmul.f32 %v2162, %v2159
    %v2164 = vmul.f32 %v2163, %v2162
    %v2165 = vmul.f32 0.5, %v2164
    %v2166 = vsub.f32 1.5, %v2165
    %v2167 = vmul.f32 %v2162, %v2166
    %vm2168 = vweird.f32 %v2159
    %vm2169 = vweird.f32 %v2162
    %vm2170 = vmor %vm2168, %vm2169
    %v2171 = vsel %vm2170, %v2162, %v2167
    %v2172 = vrsqrt.pop %v2160
    %v2173 = vmul.f32 %v2172, %v2160
    %v2174 = vmul.f32 %v2173, %v2172
    %v2175 = vmul.f32 0.5, %v2174
    %v2176 = vsub.f32 1.5, %v2175
    %v2177 = vmul.f32 %v2172, %v2176
    %vm2178 = vweird.f32 %v2160
    %vm2179 = vweird.f32 %v2172
    %vm2180 = vmor %vm2178, %vm2179
    %v2181 = vsel %vm2180, %v2172, %v2177
    %v2182 = vrsqrt.pop %v2161
    %v2183 = vmul.f32 %v2182, %v2161
    %v2184 = vmul.f32 %v2183, %v2182
    %v2185 = vmul.f32 0.5, %v2184
    %v2186 = vsub.f32 1.5, %v2185
    %v2187 = vmul.f32 %v2182, %v2186
    %vm2188 = vweird.f32 %v2161
    %vm2189 = vweird.f32 %v2182
    %vm2190 = vmor %vm2188, %vm2189
    %v2191 = vsel %vm2190, %v2182, %v2187
    %v2192 = vmul.f32 %v2141, %v2171
    %v2193 = vmul.f32 %v2142, %v2181
    %v2194 = vmul.f32 %v2143, %v2191
    %v2195 = vperm.slane %v1266, 0
    %v2196 = vmul.f32 %v2192, %v2195
    %v2197 = vmul.f32 %v2193, %v2195
    %v2198 = vmul.f32 %v2194, %v2195
    %v2199 = vperm.slane %v1267, 0
    %v2200 = vadd.f32 %v2196, %v2199
    %v2201 = vadd.f32 %v2197, %v2199
    %v2202 = vadd.f32 %v2198, %v2199
    %v2203 = vpack.c.bf16 %v2201, %v2200
    %v2204 = vpack.c.bf16 %v2202, %v2202
    %v2205 = vperm.slane %v1268, 0
    %v2210 = vunpack.c.l.b16 %v1252
    %v2211 = vunpack.c.l.b16 %v1253
    %v2212 = vunpack.c.l.b16 %v1254
    %v2213 = vunpack.c.l.b16 %v1255
    %v2214 = vpack.c.b16 %v2211, %v2210
    %v2215 = vpack.c.b16 %v2213, %v2212
    %v2219 = vsel %vm145, %v2203, 0
    %v2222 = vsel %vm145, %v2204, 0
    %2224 = vmatpush.bf16.msra.mxu0 0
    %2225 = vmatpush.bf16.msra.mxu0 0
    %2226 = vmatpush.bf16.msra.mxu0 0
    %2227 = vmatpush.bf16.msra.mxu0 0
    %2228 = vmatpush.bf16.msra.mxu0 0
    %2229 = vmatpush.bf16.msra.mxu0 0
    %2230 = vmatpush.bf16.msra.mxu0 %v2215
    %2231 = vmatpush.bf16.msra.mxu0 %v2214
    %2232 = vmatmul.bf16.gmra.mxu0 %v2219
    %v2233 = vpop.f32.mrf.mxu0
    %v2234 = vadd.f32 %v2205, %v2233
    %v2235 = vpop.f32.mrf.mxu0
    %v2236 = vadd.f32 %v2205, %v2235
    %2237 = vmatmul.bf16.gmra.mxu0 %v2222
    %v2238 = vpop.f32.mrf.mxu0
    %v2239 = vadd.f32 %v2205, %v2238
    %v2240 = vpop.f32.mrf.mxu0
    %2241 = vdwg.mxu0
    %v2242 = vmax.f32 %v2234, 0.0
    %v2243 = vmax.f32 %v2236, 0.0
    %v2244 = vmax.f32 %v2239, 0.0
    %v2245 = vpack.c.bf16 %v2243, %v2242
    %v2246 = vpack.c.bf16 %v2244, %v2244
    %v2247 = vperm.slane %v1269, 0
    %v2256 = vunpack.c.l.b16 %v1256
    %v2257 = vunpack.c.l.b16 %v1257
    %v2258 = vunpack.c.l.b16 %v1258
    %v2259 = vunpack.c.l.b16 %v1259
    %v2260 = vunpack.c.l.b16 %v1260
    %v2261 = vunpack.c.l.b16 %v1261
    %v2262 = vunpack.c.l.b16 %v1262
    %v2263 = vunpack.c.l.b16 %v1263
    %v2264 = vpack.c.b16 %v2257, %v2256
    %v2265 = vpack.c.b16 %v2259, %v2258
    %v2266 = vpack.c.b16 %v2261, %v2260
    %v2267 = vpack.c.b16 %v2263, %v2262
    %v2273 = vsel %vm1142, %v2245, 0
    %v2276 = vsel %vm1142, %v2246, 0
    %2278 = vmatpush.bf16.msra.mxu0 0
    %2279 = vmatpush.bf16.msra.mxu0 0
    %2280 = vmatpush.bf16.msra.mxu0 0
    %2281 = vmatpush.bf16.msra.mxu0 0
    %2282 = vmatpush.bf16.msra.mxu0 %v2267
    %2283 = vmatpush.bf16.msra.mxu0 %v2266
    %2284 = vmatpush.bf16.msra.mxu0 %v2265
    %2285 = vmatpush.bf16.msra.mxu0 %v2264
    %2286 = vmatmul.bf16.gmra.mxu0 %v2273
    %v2287 = vpop.f32.mrf.mxu0
    %v2288 = vpop.f32.mrf.mxu0
    %v2289 = vadd.f32 %v2247, %v2288
    %2290 = vmatmul.bf16.gmra.mxu0 %v2276
    %v2291 = vpop.f32.mrf.mxu0
    %v2292 = vadd.f32 %v2247, %v2291
    %v2293 = vpop.f32.mrf.mxu0
    %2294 = vdwg.mxu0
    %v2295 = vadd.f32 %v2201, %v2289
    %v2296 = vadd.f32 %v2202, %v2292
    %v2297 = vsel %vm145, %v2295, 0.0
    %2298 = vadd.xlane.f32.xlu0 %v2297
    %v2299 = vpop.xlane.xlu0 %2298
    %v2300 = vsel %vm145, %v2296, 0.0
    %2301 = vadd.xlane.f32.xlu0 %v2300
    %v2302 = vpop.xlane.xlu0 %2301
    %v2303 = vmul.f32 %v2299, %v1007
    %v2304 = vmul.f32 %v2302, %v1007
    %v2305 = vsub.f32 %v2295, %v2303
    %v2306 = vsub.f32 %v2296, %v2304
    %v2307 = vmul.f32 %v2305, %v2305
    %v2308 = vmul.f32 %v2306, %v2306
    %v2309 = vsel %vm145, %v2307, 0.0
    %2310 = vadd.xlane.f32.xlu0 %v2309
    %v2311 = vpop.xlane.xlu0 %2310
    %v2312 = vsel %vm145, %v2308, 0.0
    %2313 = vadd.xlane.f32.xlu0 %v2312
    %v2314 = vpop.xlane.xlu0 %2313
    %v2315 = vmul.f32 %v2311, %v1007
    %v2316 = vmul.f32 %v2314, %v1007
    %v2317 = vadd.f32 %v2315, 1e-05
    %v2318 = vadd.f32 %v2316, 1e-05
    %v2319 = vrsqrt.pop %v2317
    %v2320 = vmul.f32 %v2319, %v2317
    %v2321 = vmul.f32 %v2320, %v2319
    %v2322 = vmul.f32 0.5, %v2321
    %v2323 = vsub.f32 1.5, %v2322
    %v2324 = vmul.f32 %v2319, %v2323
    %vm2325 = vweird.f32 %v2317
    %vm2326 = vweird.f32 %v2319
    %vm2327 = vmor %vm2325, %vm2326
    %v2328 = vsel %vm2327, %v2319, %v2324
    %v2329 = vrsqrt.pop %v2318
    %v2330 = vmul.f32 %v2329, %v2318
    %v2331 = vmul.f32 %v2330, %v2329
    %v2332 = vmul.f32 0.5, %v2331
    %v2333 = vsub.f32 1.5, %v2332
    %v2334 = vmul.f32 %v2329, %v2333
    %vm2335 = vweird.f32 %v2318
    %vm2336 = vweird.f32 %v2329
    %vm2337 = vmor %vm2335, %vm2336
    %v2338 = vsel %vm2337, %v2329, %v2334
    %v2339 = vmul.f32 %v2305, %v2328
    %v2340 = vmul.f32 %v2306, %v2338
    %v2341 = vperm.slane %v1270, 0
    %v2342 = vmul.f32 %v2339, %v2341
    %v2343 = vmul.f32 %v2340, %v2341
    %v2344 = vperm.slane %v1271, 0
    %v2345 = vadd.f32 %v2342, %v2344
    %v2346 = vadd.f32 %v2343, %v2344
    %v2348 = vrot.slane %v2345, 3
    %v2351 = vrot.slane %v2346, 6
    %vm2353 = vcmask 1040384
    %v2354 = vsel %vm2353, %v2348, %v2351
    %v2355 = vld [vmem:[#allocation2 + $0xa8] sm:$0xf]
    %v2356 = vld [vmem:[#allocation2 + $0xac] sm:$0xf]
    %v2357 = vld [vmem:[#allocation2 + $0xb0] sm:$0xf]
    %v2358 = vld [vmem:[#allocation2 + $0xb4] sm:$0xf]
    %v2359 = vld [vmem:[#allocation5 + $0x98] sm:$0x1]
    %v2360 = vpack.c.bf16 %v2354, %v2354
    %v2361 = vperm.slane %v2359, 0
    %v2366 = vunpack.c.l.b16 %v2355
    %v2367 = vunpack.c.l.b16 %v2356
    %v2368 = vunpack.c.l.b16 %v2357
    %v2369 = vunpack.c.l.b16 %v2358
    %v2370 = vpack.c.b16 %v2367, %v2366
    %v2371 = vpack.c.b16 %v2369, %v2368
    %v2375 = vsel %vm145, %v2360, 0
    %2377 = vmatpush.bf16.msra.mxu0 0
    %2378 = vmatpush.bf16.msra.mxu0 0
    %2379 = vmatpush.bf16.msra.mxu0 0
    %2380 = vmatpush.bf16.msra.mxu0 0
    %2381 = vmatpush.bf16.msra.mxu0 0
    %2382 = vmatpush.bf16.msra.mxu0 0
    %2383 = vmatpush.bf16.msra.mxu0 %v2371
    %2384 = vmatpush.bf16.msra.mxu0 %v2370
    %2385 = vmatmul.bf16.gmra.mxu0 %v2375
    %v2386 = vpop.f32.mrf.mxu0
    %v2387 = vadd.f32 %v2361, %v2386
    %v2388 = vpop.f32.mrf.mxu0
    %2389 = vdwg.mxu0
    %vm2390 = vcmask 17408
    %2391 = vst.msk [vmem:[#allocation7] sm:$0x3] %vm2390, %v2387
    // Predicated region
    $region22: #{tpu_custom_call.1} parent=1 // pred_check
      _
    $region23: #{tpu_custom_call.1} parent=1 // pred_check_branch
      %2393 = sbr.rel (0) target = $region25
    $region24: #{tpu_custom_call.1} parent=1 // pred_region
      %2395 = vsyncadd [#allocation4], 0
      %s2397 = sshll.u32 [#allocation7], 4
      %s2398 = int_to_ptr.vmem [resolvable:$true] %s2397
      %s2399 = sshll.u32 %s3, 4
      %s2400 = int_to_ptr.hbm [resolvable:$true] %s2399
      %2402 = dma.vmem_to_hbm [thread:$0]  %s2398, 32, %s2400, [#allocation4]
    $region25: #{tpu_custom_call.1} parent=1 // pred_fallthru
      _
    // Predicated region
    $region26: #{tpu_custom_call.1} parent=1 // pred_check
      _
    $region27: #{tpu_custom_call.1} parent=1 // pred_check_branch
      %2404 = sbr.rel (0) target = $region29
    $region28: #{tpu_custom_call.1} parent=1 // pred_region
      %2406 = dma.done [#allocation4], 32
    $region29: #{tpu_custom_call.1} parent=1 // pred_fallthru
      _
    %2407 = vsyncpa [#allocation3], 1
    %2408 = vsyncpa [#allocation6], 1
    %2409 = vsyncpa [#allocation4], 1

</llo_original>
